<compile_context>
chip_gen: v7x
topology: tpu7x:2x2x1
jax: 0.10.0
libtpu: 0.0.40
codegen_flags: <defaults>
</compile_context>

<pallas_src>
import functools

import jax
import jax.numpy as jnp
from jax.experimental import pallas as pl
from jax.experimental.pallas import tpu as pltpu

EPS = 1e-5  # InPlaceABN default eps


# ------------------------------------------------------------------ utilities
def _rup(x, m):
    return (x + m - 1) // m * m


def _pick_vmem_limit():
    try:
        kind = jax.devices()[0].device_kind.lower()
    except Exception:
        kind = ""
    if any(tag in kind for tag in ("v4", "v5", "v6")):
        return 96 * 1024 * 1024          # 128 MiB physical VMEM
    return 48 * 1024 * 1024              # v7x-safe (64 MiB physical per TC)


VMEM_LIMIT = _pick_vmem_limit()


def _pick_tile(total, cap=2048):
    """Row-tile size (multiple of 8) that is large but keeps padding small."""
    t8 = _rup(total, 8)
    if t8 <= cap:
        return t8
    t = cap
    while t > 256 and _rup(total, t) - total > max(total // 16, 8):
        t //= 2
    return t


def _apply_act(y, act, alpha):
    if act == "leaky_relu":
        return jnp.where(y >= 0.0, y, alpha * y)
    if act == "relu":
        return jnp.maximum(y, 0.0)
    if act == "sigmoid":
        return jax.nn.sigmoid(y)
    return y


def _vmem_specs(n):
    return [pl.BlockSpec(memory_space=pltpu.MemorySpace.VMEM) for _ in range(n)]


# ----------------------------------------------------- tiled matmul (1x1 conv)
def _mm_abn_kernel(*refs, act, alpha, has_res):
    if has_res:
        a_ref, b_ref, s_ref, t_ref, r_ref, o_ref, acc_ref = refs
    else:
        a_ref, b_ref, s_ref, t_ref, o_ref, acc_ref = refs
        r_ref = None
    kk = pl.program_id(2)

    @pl.when(kk == 0)
    def _():
        acc_ref[...] = jnp.zeros_like(acc_ref)

    acc_ref[...] += jnp.dot(a_ref[...], b_ref[...],
                            preferred_element_type=jnp.float32)

    @pl.when(kk == pl.num_programs(2) - 1)
    def _():
        y = acc_ref[...] * s_ref[...] + t_ref[...]
        y = _apply_act(y, act, alpha)
        if has_res:
            y = jnp.maximum(y + r_ref[...].astype(jnp.float32), 0.0)
        o_ref[...] = y.astype(o_ref.dtype)


def matmul_abn(a, b, scale, shift, act="identity", alpha=0.0, residual=None):
    """act((a @ b) * scale + shift) [+ residual, ReLU]; bf16 MXU, f32 epilogue."""
    m, k = a.shape
    n = b.shape[1]
    tm = min(512, _rup(m, 8))
    tn = 512 if n % 512 == 0 else (256 if n % 256 == 0 else 128)
    tk = 512 if k % 512 == 0 else (256 if k % 256 == 0 else 128)
    mp = _rup(m, tm)
    a = a.astype(jnp.bfloat16)
    if mp != m:
        a = jnp.pad(a, ((0, mp - m), (0, 0)))
        if residual is not None:
            residual = jnp.pad(residual, ((0, mp - m), (0, 0)))
    has_res = residual is not None

    in_specs = [
        pl.BlockSpec((tm, tk), lambda i, j, kk: (i, kk)),
        pl.BlockSpec((tk, tn), lambda i, j, kk: (kk, j)),
        pl.BlockSpec((1, tn), lambda i, j, kk: (0, j)),
        pl.BlockSpec((1, tn), lambda i, j, kk: (0, j)),
    ]
    args = [a, b, scale, shift]
    if has_res:
        in_specs.append(pl.BlockSpec((tm, tn), lambda i, j, kk: (i, j)))
        args.append(residual.astype(jnp.bfloat16))

    out = pl.pallas_call(
        functools.partial(_mm_abn_kernel, act=act, alpha=alpha, has_res=has_res),
        out_shape=jax.ShapeDtypeStruct((mp, n), jnp.bfloat16),
        grid=(mp // tm, n // tn, k // tk),
        in_specs=in_specs,
        out_specs=pl.BlockSpec((tm, tn), lambda i, j, kk: (i, j)),
        scratch_shapes=[pltpu.VMEM((tm, tn), jnp.float32)],
        compiler_params=pltpu.CompilerParams(
            dimension_semantics=("parallel", "parallel", "arbitrary"),
            vmem_limit_bytes=VMEM_LIMIT),
    )(*args)
    return out[:m] if mp != m else out


def conv1x1_abn(x, cp, act="identity", alpha=0.0, residual=None):
    n, h, w, cin = x.shape
    m = n * h * w
    a = x.reshape(m, cin)
    res2 = residual.reshape(m, residual.shape[-1]) if residual is not None else None
    y = matmul_abn(a, cp["w"], cp["scale"], cp["shift"], act=act, alpha=alpha,
                   residual=res2)
    return y.reshape(n, h, w, cp["w"].shape[1])


# ----------------------------------------------- 3x3 conv (flattened, aligned)
def _conv3x3_kernel(x_ref, w_ref, s_ref, t_ref, o_ref, *,
                    cinp, wp2, s_rows, h, w, act, alpha):
    tn = o_ref.shape[-1]
    span = s_rows + 2 * wp2
    # Merge the 3 horizontal taps along the lane axis (K = 3*cinp) so each
    # remaining vertical-tap matmul fills a 256-wide MXU, and every window
    # start (i*wp2) is sublane-aligned (wp2 % 8 == 0).
    xcat = jnp.concatenate(
        [x_ref[pl.ds(j, span), :] for j in range(3)], axis=-1)
    acc = jnp.zeros((s_rows, tn), jnp.float32)
    for i in range(3):
        a = xcat[i * wp2:i * wp2 + s_rows, :]
        wt = w_ref[pl.ds(i * 3 * cinp, 3 * cinp), :]
        acc = acc + jnp.dot(a, wt, preferred_element_type=jnp.float32)
    y = acc * s_ref[...] + t_ref[...]
    y = _apply_act(y, act, alpha)
    # In-kernel border mask (zero-pads the flat layout for possible chaining).
    rows = jax.lax.broadcasted_iota(jnp.int32, (s_rows, tn), 0)
    row_ok = (rows >= wp2) & (rows < (h + 1) * wp2)
    if (wp2 & (wp2 - 1)) == 0:
        ww = rows & (wp2 - 1)
    else:
        ww = rows % wp2
    col_ok = (ww >= 1) & (ww <= w)
    y = jnp.where(row_ok & col_ok, y, 0.0)
    o_ref[...] = y.astype(o_ref.dtype)


def conv3x3_abn(x, cp, act="leaky_relu", alpha=0.01, hw=None,
                input_flat=False, output_flat=False):
    """3x3, stride 1, padding 1 conv + ABN affine + activation.

    Operates on a flattened (N, (h+2)*wp2, C) zero-bordered layout with
    wp2 = round_up(w+2, 8).  `input_flat`/`output_flat` allow chaining two
    3x3 convs without unflatten/reflatten HBM passes.
    """
    coutp = cp["w"].shape[1]
    cinp = cp["w"].shape[0] // 9
    if input_flat:
        h, w = hw
    else:
        _, h, w, _ = x.shape
    wp2 = _rup(w + 2, 8)
    s = (h + 2) * wp2
    front = wp2 + 1
    s2 = _rup(front + s + wp2 + 1, 8)
    back = s2 - s - front

    if input_flat:
        xflat = x
    else:
        # TODO(synk): the spatial pad and the halo pad below could be folded.
        xp = jnp.pad(x, ((0, 0), (1, 1), (1, wp2 - w - 1), (0, 0)))
        xflat = xp.reshape(x.shape[0], s, cinp)
    n = xflat.shape[0]
    xf = jnp.pad(xflat.astype(jnp.bfloat16), ((0, 0), (front, back), (0, 0)))

    tn = 256 if coutp % 256 == 0 else 128
    kernel = functools.partial(_conv3x3_kernel, cinp=cinp, wp2=wp2, s_rows=s,
                               h=h, w=w, act=act, alpha=alpha)
    # TODO(synk): for very large images (v7x 64 MiB VMEM), tile s along a grid
    # axis with halo-overlapping row blocks instead of whole-image blocks.
    out = pl.pallas_call(
        kernel,
        out_shape=jax.ShapeDtypeStruct((n, s, coutp), jnp.bfloat16),
        grid=(n, coutp // tn),
        in_specs=[
            pl.BlockSpec((None, s2, cinp), lambda b, j: (b, 0, 0)),
            pl.BlockSpec((9 * cinp, tn), lambda b, j: (0, j)),
            pl.BlockSpec((1, tn), lambda b, j: (0, j)),
            pl.BlockSpec((1, tn), lambda b, j: (0, j)),
        ],
        out_specs=pl.BlockSpec((None, s, tn), lambda b, j: (b, 0, j)),
        compiler_params=pltpu.CompilerParams(
            dimension_semantics=("parallel", "parallel"),
            vmem_limit_bytes=VMEM_LIMIT),
    )(xf, cp["w"], cp["scale"], cp["shift"])
    if output_flat:
        return out
    return out.reshape(n, h + 2, wp2, coutp)[:, 1:h + 1, 1:w + 1, :]


# -------------------------- anti-alias blur with fused stride-2 (VPU, no MXU)
def _blur_ds_kernel(e00_ref, e01_ref, e10_ref, e11_ref, o_ref, *, ho, wo):
    e00 = e00_ref[...].astype(jnp.float32)
    e01 = e01_ref[...].astype(jnp.float32)
    e10 = e10_ref[...].astype(jnp.float32)
    e11 = e11_ref[...].astype(jnp.float32)
    acc = (e00[:ho, :wo, :] + e00[:ho, 1:wo + 1, :]
           + e00[1:ho + 1, :wo, :] + e00[1:ho + 1, 1:wo + 1, :])
    acc = acc + 2.0 * (e01[:ho, :, :] + e01[1:ho + 1, :, :]
                       + e10[:, :wo, :] + e10[:, 1:wo + 1, :])
    acc = acc + 4.0 * e11
    o_ref[...] = (acc * (1.0 / 16.0)).astype(o_ref.dtype)


def anti_alias_downsample(x):
    """Depthwise [1,2,1]x[1,2,1]/16 blur, stride 2, padding 1 (fused subsample)."""
    n, h, w, c = x.shape
    ho, wo = -(-h // 2), -(-w // 2)
    hp, wpd = 2 * (ho + 1), 2 * (wo + 1)
    xp = jnp.pad(x, ((0, 0), (1, hp - h - 1), (1, wpd - w - 1), (0, 0)))
    # Parity planes: E_pq[a, b] = x_pad[2a + p, 2b + q].
    e00 = xp[:, 0::2, 0::2, :]                    # (n, ho+1, wo+1, c)
    e01 = xp[:, 0::2, 1::2, :][:, :, :wo, :]      # (n, ho+1, wo,   c)
    e10 = xp[:, 1::2, 0::2, :][:, :ho, :, :]      # (n, ho,   wo+1, c)
    e11 = xp[:, 1::2, 1::2, :][:, :ho, :wo, :]    # (n, ho,   wo,   c)
    return pl.pallas_call(
        functools.partial(_blur_ds_kernel, ho=ho, wo=wo),
        out_shape=jax.ShapeDtypeStruct((n, ho, wo, c), jnp.bfloat16),
        grid=(n,),
        in_specs=[
            pl.BlockSpec((None, ho + 1, wo + 1, c), lambda b: (b, 0, 0, 0)),
            pl.BlockSpec((None, ho + 1, wo, c), lambda b: (b, 0, 0, 0)),
            pl.BlockSpec((None, ho, wo + 1, c), lambda b: (b, 0, 0, 0)),
            pl.BlockSpec((None, ho, wo, c), lambda b: (b, 0, 0, 0)),
        ],
        out_specs=pl.BlockSpec((None, ho, wo, c), lambda b: (b, 0, 0, 0)),
        compiler_params=pltpu.CompilerParams(
            dimension_semantics=("parallel",),
            vmem_limit_bytes=VMEM_LIMIT),
    )(e00, e01, e10, e11)


# ------------------------------------------------------ pooling / SE / gating
def _pool_kernel(x_ref, o_ref, *, inv_count):
    hstep = pl.program_id(1)

    @pl.when(hstep == 0)
    def _():
        o_ref[...] = jnp.zeros_like(o_ref)

    o_ref[...] += jnp.sum(x_ref[...].astype(jnp.float32), axis=0, keepdims=True)

    @pl.when(hstep == pl.num_programs(1) - 1)
    def _():
        o_ref[...] = o_ref[...] * inv_count


def spatial_mean(x):
    """(N, H, W, Cp) bf16 -> (N, Cp) f32 mean over spatial positions."""
    n, h, w, cpad = x.shape
    hw = h * w
    x3 = x.reshape(n, hw, cpad)
    thw = _pick_tile(hw)
    hwp = _rup(hw, thw)
    if hwp != hw:
        x3 = jnp.pad(x3, ((0, 0), (0, hwp - hw), (0, 0)))
    out = pl.pallas_call(
        functools.partial(_pool_kernel, inv_count=1.0 / hw),
        out_shape=jax.ShapeDtypeStruct((n, 1, cpad), jnp.float32),
        grid=(n, hwp // thw),
        in_specs=[pl.BlockSpec((None, thw, cpad), lambda b, hh: (b, hh, 0))],
        out_specs=pl.BlockSpec((None, 1, cpad), lambda b, hh: (b, 0, 0)),
        compiler_params=pltpu.CompilerParams(
            dimension_semantics=("parallel", "arbitrary"),
            vmem_limit_bytes=VMEM_LIMIT),
    )(x3)
    return out[:, 0, :]


def _se_fc_kernel(p_ref, w1_ref, b1_ref, w2_ref, b2_ref, o_ref):
    p = p_ref[...].astype(jnp.bfloat16)
    hdn = jnp.maximum(
        jnp.dot(p, w1_ref[...], preferred_element_type=jnp.float32) + b1_ref[...],
        0.0)
    o_ref[...] = jax.nn.sigmoid(
        jnp.dot(hdn.astype(jnp.bfloat16), w2_ref[...],
                preferred_element_type=jnp.float32) + b2_ref[...])


def se_gate(x, se_p):
    """SEModule pooling + fc1/ReLU/fc2/sigmoid fused in one tiny kernel."""
    n = x.shape[0]
    cpad = x.shape[-1]
    pooled = spatial_mean(x)
    npad = _rup(n, 8)
    if npad != n:
        pooled = jnp.pad(pooled, ((0, npad - n), (0, 0)))
    gate = pl.pallas_call(
        _se_fc_kernel,
        out_shape=jax.ShapeDtypeStruct((npad, cpad), jnp.float32),
        in_specs=_vmem_specs(5),
        out_specs=pl.BlockSpec(memory_space=pltpu.MemorySpace.VMEM),
        compiler_params=pltpu.CompilerParams(vmem_limit_bytes=VMEM_LIMIT),
    )(pooled, se_p["w1"], se_p["b1"], se_p["w2"], se_p["b2"])
    return gate[:n]


def _gate_add_relu_kernel(x_ref, g_ref, r_ref, o_ref):
    y = x_ref[...].astype(jnp.float32) * g_ref[...] + r_ref[...].astype(jnp.float32)
    o_ref[...] = jnp.maximum(y, 0.0).astype(o_ref.dtype)


def _gate_kernel(x_ref, g_ref, o_ref):
    o_ref[...] = (x_ref[...].astype(jnp.float32) * g_ref[...]).astype(o_ref.dtype)


def gated_ewise(x, gate, residual=None):
    """x * gate (gate broadcast in-kernel) [+ residual, ReLU]."""
    n, h, w, cpad = x.shape
    hw = h * w
    thw = _pick_tile(hw)
    hwp = _rup(hw, thw)

    def prep(t):
        t3 = t.reshape(n, hw, cpad)
        if hwp != hw:
            t3 = jnp.pad(t3, ((0, 0), (0, hwp - hw), (0, 0)))
        return t3

    xspec = pl.BlockSpec((None, thw, cpad), lambda b, hh: (b, hh, 0))
    gspec = pl.BlockSpec((None, 1, cpad), lambda b, hh: (b, 0, 0))
    g3 = gate.reshape(n, 1, cpad)
    if residual is not None:
        kernel, in_specs, args = (_gate_add_relu_kernel, [xspec, gspec, xspec],
                                  (prep(x), g3, prep(residual)))
    else:
        kernel, in_specs, args = _gate_kernel, [xspec, gspec], (prep(x), g3)

    out = pl.pallas_call(
        kernel,
        out_shape=jax.ShapeDtypeStruct((n, hwp, cpad), jnp.bfloat16),
        grid=(n, hwp // thw),
        in_specs=in_specs,
        out_specs=pl.BlockSpec((None, thw, cpad), lambda b, hh: (b, hh, 0)),
        compiler_params=pltpu.CompilerParams(
            dimension_semantics=("parallel", "parallel"),
            vmem_limit_bytes=VMEM_LIMIT),
    )(*args)
    return out[:, :hw, :].reshape(n, h, w, cpad)


# -------------------------------------------------------------------- head
def _head_kernel(e_ref, w1_ref, b1_ref, w2_ref, b2_ref, o_ref):
    e = e_ref[...].astype(jnp.bfloat16)
    hdn = jnp.maximum(
        jnp.dot(e, w1_ref[...], preferred_element_type=jnp.float32) + b1_ref[...],
        0.0)
    o_ref[...] = jnp.dot(hdn.astype(jnp.bfloat16), w2_ref[...],
                         preferred_element_type=jnp.float32) + b2_ref[...]


def head_forward(emb, hp):
    n = emb.shape[0]
    npad = _rup(n, 8)
    if npad != n:
        emb = jnp.pad(emb, ((0, npad - n), (0, 0)))
    logits = pl.pallas_call(
        _head_kernel,
        out_shape=jax.ShapeDtypeStruct((npad, hp["w2"].shape[1]), jnp.float32),
        in_specs=_vmem_specs(5),
        out_specs=pl.BlockSpec(memory_space=pltpu.MemorySpace.VMEM),
        compiler_params=pltpu.CompilerParams(vmem_limit_bytes=VMEM_LIMIT),
    )(emb, hp["w1"], hp["b1"], hp["w2"], hp["b2"])
    return logits[:n, :hp["num_classes"]]


# ---------------------------------------------------------------- glue (XLA)
def avg_pool_2x2_ceil(x):
    """nn.AvgPool2d(2, 2, ceil_mode=True, count_include_pad=False) — XLA glue."""
    n, h, w, c = x.shape
    ho, wo = -(-h // 2), -(-w // 2)
    ph, pw = ho * 2 - h, wo * 2 - w
    xp = jnp.pad(x.astype(jnp.float32), ((0, 0), (0, ph), (0, pw), (0, 0)))
    ssum = xp.reshape(n, ho, 2, wo, 2, c).sum(axis=(2, 4))
    ones = jnp.pad(jnp.ones((1, h, w, 1), jnp.float32), ((0, 0), (0, ph), (0, pw), (0, 0)))
    cnt = ones.reshape(1, ho, 2, wo, 2, 1).sum(axis=(2, 4))
    return (ssum / cnt).astype(jnp.bfloat16)


def space_to_depth(x_nchw, bs=4):
    n, c, h, w = x_nchw.shape
    x = x_nchw.reshape(n, c, h // bs, bs, w // bs, bs)
    x = jnp.transpose(x, (0, 3, 5, 1, 2, 4))
    return x.reshape(n, c * bs * bs, h // bs, w // bs)


# ------------------------------------------------------------------ blocks
def _downsample(x, d, stride):
    r = avg_pool_2x2_ceil(x) if stride == 2 else x
    return conv1x1_abn(r, d, act="identity")


def basic_block(x, p):
    stride = p["stride"]
    residual = _downsample(x, p["downsample"], stride) if p["downsample"] is not None else x
    if stride == 1:
        _, h, w, _ = x.shape
        # Chain conv1 -> conv2 in the zero-masked flattened layout.
        out_f = conv3x3_abn(x, p["conv1"], act="leaky_relu", alpha=0.001,
                            output_flat=True)
        out = conv3x3_abn(out_f, p["conv2"], act="identity", hw=(h, w),
                          input_flat=True)
    else:
        out = conv3x3_abn(x, p["conv1"], act="leaky_relu", alpha=0.001)
        out = anti_alias_downsample(out)
        out = conv3x3_abn(out, p["conv2"], act="identity")
    if p["se"] is not None:
        gate = se_gate(out, p["se"])
    else:
        gate = jnp.ones((out.shape[0], out.shape[-1]), jnp.float32)
    return gated_ewise(out, gate, residual=residual)          # relu(out*g + res)


def bottleneck_block(x, p):
    stride = p["stride"]
    residual = _downsample(x, p["downsample"], stride) if p["downsample"] is not None else x
    out = conv1x1_abn(x, p["conv1"], act="leaky_relu", alpha=0.001)
    out = conv3x3_abn(out, p["conv2"], act="leaky_relu", alpha=0.001)
    if stride == 2:
        out = anti_alias_downsample(out)
    if p["se"] is not None:
        gate = se_gate(out, p["se"])
        out = gated_ewise(out, gate)
    # conv3 + residual add + ReLU fused into the matmul epilogue
    return conv1x1_abn(out, p["conv3"], act="identity", residual=residual)


# ----------------------------------------------------------------- full model
def tresnet_forward(params, x_nchw):
    x = space_to_depth(x_nchw.astype(jnp.float32), 4)          # (N, 16*C, H/4, W/4)
    x = jnp.transpose(x, (0, 2, 3, 1))                          # NHWC
    cin = x.shape[-1]
    cinp = _rup(cin, 128)
    x = jnp.pad(x, ((0, 0), (0, 0), (0, 0), (0, cinp - cin))).astype(jnp.bfloat16)
    x = conv3x3_abn(x, params["conv1"], act="leaky_relu", alpha=0.01)
    for bp in params["layer1"]:
        x = basic_block(x, bp)
    for bp in params["layer2"]:
        x = basic_block(x, bp)
    for bp in params["layer3"]:
        x = bottleneck_block(x, bp)
    for bp in params["layer4"]:
        x = bottleneck_block(x, bp)
    emb = spatial_mean(x)                                       # global pool, f32
    return head_forward(emb, params["head"])


# ------------------------------------------------------------- parameter init
def _conv_w(key, cout, cin, k):
    std = (2.0 / (cout * k * k)) ** 0.5  # kaiming_normal_, mode=fan_out
    return std * jax.random.normal(key, (cout, cin, k, k), jnp.float32)


def _basic_block_params(key, inplanes, planes, stride):
    ks = jax.random.split(key, 6)
    p = {
        "stride": stride,
        "conv1_w": _conv_w(ks[0], planes, inplanes, 3),
        "conv1_gamma": jnp.ones((planes,)), "conv1_beta": jnp.zeros((planes,)),
        "conv2_w": _conv_w(ks[1], planes, planes, 3),
        "conv2_gamma": jnp.zeros((planes,)),  # zeroed in TResNet.__init__
        "conv2_beta": jnp.zeros((planes,)),
    }
    reduce_c = max(planes // 4, 64)
    p["se"] = {
        "fc1_w": _conv_w(ks[2], reduce_c, planes, 1), "fc1_b": jnp.zeros((reduce_c,)),
        "fc2_w": _conv_w(ks[3], planes, reduce_c, 1), "fc2_b": jnp.zeros((planes,)),
    }
    if stride != 1 or inplanes != planes:
        p["downsample"] = {"w": _conv_w(ks[4], planes, inplanes, 1),
                           "gamma": jnp.ones((planes,)), "beta": jnp.zeros((planes,))}
    else:
        p["downsample"] = None
    return p


def _bottleneck_params(key, inplanes, planes, stride, use_se):
    ks = jax.random.split(key, 7)
    exp = 4
    p = {
        "stride": stride,
        "conv1_w": _conv_w(ks[0], planes, inplanes, 1),
        "conv1_gamma": jnp.ones((planes,)), "conv1_beta": jnp.zeros((planes,)),
        "conv2_w": _conv_w(ks[1], planes, planes, 3),
        "conv2_gamma": jnp.ones((planes,)), "conv2_beta": jnp.zeros((planes,)),
        "conv3_w": _conv_w(ks[2], planes * exp, planes, 1),
        "conv3_gamma": jnp.zeros((planes * exp,)),  # zeroed in TResNet.__init__
        "conv3_beta": jnp.zeros((planes * exp,)),
    }
    if use_se:
        reduce_c = max(planes * exp // 8, 64)
        p["se"] = {
            "fc1_w": _conv_w(ks[3], reduce_c, planes, 1), "fc1_b": jnp.zeros((reduce_c,)),
            "fc2_w": _conv_w(ks[4], planes, reduce_c, 1), "fc2_b": jnp.zeros((planes,)),
        }
    else:
        p["se"] = None
    if stride != 1 or inplanes != planes * exp:
        p["downsample"] = {"w": _conv_w(ks[5], planes * exp, inplanes, 1),
                           "gamma": jnp.ones((planes * exp,)), "beta": jnp.zeros((planes * exp,))}
    else:
        p["downsample"] = None
    return p


def init_params(key, layers=(1, 1, 1, 1), in_chans=3, num_classes=10, width_factor=0.25):
    planes = int(64 * width_factor)
    keys = jax.random.split(key, 8)
    params = {"conv1": {"w": _conv_w(keys[0], planes, in_chans * 16, 3),
                        "gamma": jnp.ones((planes,)), "beta": jnp.zeros((planes,))}}
    inplanes = planes

    def make_layer(key_i, block_fn, out_planes, n_blocks, stride, use_se, expansion):
        nonlocal inplanes
        blocks = []
        for b in range(n_blocks):
            s = stride if b == 0 else 1
            if block_fn is _basic_block_params:
                blocks.append(block_fn(jax.random.fold_in(key_i, b), inplanes, out_planes, s))
            else:
                blocks.append(block_fn(jax.random.fold_in(key_i, b), inplanes, out_planes, s, use_se))
            inplanes = out_planes * expansion
        return blocks

    params["layer1"] = make_layer(keys[1], _basic_block_params, planes, layers[0], 1, True, 1)
    params["layer2"] = make_layer(keys[2], _basic_block_params, planes * 2, layers[1], 2, True, 1)
    params["layer3"] = make_layer(keys[3], _bottleneck_params, planes * 4, layers[2], 2, True, 4)
    params["layer4"] = make_layer(keys[4], _bottleneck_params, planes * 8, layers[3], 2, False, 4)

    num_features = planes * 8 * 4
    params["head"] = {
        "fc1_w": 0.01 * jax.random.normal(keys[5], (num_features // 4, num_features), jnp.float32),
        "fc1_b": jnp.zeros((num_features // 4,)),
        "fc2_w": 0.01 * jax.random.normal(keys[6], (num_classes, num_features // 4), jnp.float32),
        "fc2_b": jnp.zeros((num_classes,)),
    }
    return params


# ------------------------------------------- parameter prep (pad once, bf16)
def _prep_conv(w, gamma, beta):
    cout, cin, k, _ = w.shape
    cinp, coutp = _rup(cin, 128), _rup(cout, 128)
    wt = jnp.transpose(w, (2, 3, 1, 0))                       # (k, k, cin, cout)
    wt = jnp.pad(wt, ((0, 0), (0, 0), (0, cinp - cin), (0, coutp - cout)))
    wt = wt.reshape(k * k * cinp, coutp).astype(jnp.bfloat16)
    scale = jnp.pad(gamma / jnp.sqrt(1.0 + EPS), (0, coutp - cout)).reshape(1, coutp)
    shift = jnp.pad(beta, (0, coutp - cout)).reshape(1, coutp)
    return {"w": wt, "scale": scale.astype(jnp.float32), "shift": shift.astype(jnp.float32)}


def _prep_se(se):
    r, c = se["fc1_w"].shape[:2]
    rp, cp = _rup(r, 128), _rup(c, 128)
    return {
        "w1": jnp.pad(se["fc1_w"][:, :, 0, 0].T, ((0, cp - c), (0, rp - r))).astype(jnp.bfloat16),
        "b1": jnp.pad(se["fc1_b"], (0, rp - r)).reshape(1, rp).astype(jnp.float32),
        "w2": jnp.pad(se["fc2_w"][:, :, 0, 0].T, ((0, rp - r), (0, cp - c))).astype(jnp.bfloat16),
        "b2": jnp.pad(se["fc2_b"], (0, cp - c)).reshape(1, cp).astype(jnp.float32),
    }


def prepare_params(raw):
    def prep_block(bp, kind):
        out = {"stride": bp["stride"],
               "conv1": _prep_conv(bp["conv1_w"], bp["conv1_gamma"], bp["conv1_beta"]),
               "conv2": _prep_conv(bp["conv2_w"], bp["conv2_gamma"], bp["conv2_beta"])}
        if kind == "bottleneck":
            out["conv3"] = _prep_conv(bp["conv3_w"], bp["conv3_gamma"], bp["conv3_beta"])
        out["downsample"] = (_prep_conv(bp["downsample"]["w"], bp["downsample"]["gamma"],
                                        bp["downsample"]["beta"])
                             if bp["downsample"] is not None else None)
        out["se"] = _prep_se(bp["se"]) if bp["se"] is not None else None
        return out

    prepared = {"conv1": _prep_conv(raw["conv1"]["w"], raw["conv1"]["gamma"], raw["conv1"]["beta"])}
    prepared["layer1"] = [prep_block(b, "basic") for b in raw["layer1"]]
    prepared["layer2"] = [prep_block(b, "basic") for b in raw["layer2"]]
    prepared["layer3"] = [prep_block(b, "bottleneck") for b in raw["layer3"]]
    prepared["layer4"] = [prep_block(b, "bottleneck") for b in raw["layer4"]]

    hd = raw["head"]
    f4, f = hd["fc1_w"].shape
    ncls = hd["fc2_w"].shape[0]
    fp, f4p, nclsp = _rup(f, 128), _rup(f4, 128), _rup(ncls, 128)
    prepared["head"] = {
        "w1": jnp.pad(hd["fc1_w"].T, ((0, fp - f), (0, f4p - f4))).astype(jnp.bfloat16),
        "b1": jnp.pad(hd["fc1_b"], (0, f4p - f4)).reshape(1, f4p).astype(jnp.float32),
        "w2": jnp.pad(hd["fc2_w"].T, ((0, f4p - f4), (0, nclsp - ncls))).astype(jnp.bfloat16),
        "b2": jnp.pad(hd["fc2_b"], (0, nclsp - ncls)).reshape(1, nclsp).astype(jnp.float32),
        "num_classes": ncls,
    }
    return prepared


if __name__ == "__main__":
    key = jax.random.PRNGKey(0)
    pkey, xkey = jax.random.split(key)
    raw = init_params(pkey, layers=(1, 1, 1, 1), in_chans=3, num_classes=10, width_factor=0.25)
    params = prepare_params(raw)
    x = jax.random.normal(xkey, (2, 3, 32, 32), jnp.float32)  # NCHW, like PyTorch
    logits = tresnet_forward(params, x)
    logits = jax.block_until_ready(logits)
    assert logits.shape == (2, 10)
    assert bool(jnp.all(jnp.isfinite(logits)))
    print("KERNEL_OK")
</pallas_src>

<mosaic_0001>
module attributes {stable_mosaic.version = 11 : i64} {
  func.func @_conv3x3_kernel(%arg0: i32, %arg1: i32, %arg2: memref<1x200x128xbf16, #tpu.memory_space<vmem>>, %arg3: memref<1152x128xbf16, #tpu.memory_space<vmem>>, %arg4: memref<1x128xf32, #tpu.memory_space<vmem>>, %arg5: memref<1x128xf32, #tpu.memory_space<vmem>>, %arg6: memref<1x160x128xbf16, #tpu.memory_space<vmem>>) attributes {dimension_semantics = [#tpu.dimension_semantics<parallel>, #tpu.dimension_semantics<parallel>], iteration_bounds = array<i64: 2, 1>, scalar_prefetch = 0 : i64, scratch_operands = 0 : i64, tpu.core_type = #tpu.core_type<tc>, window_params = [{transform_indices = @transform_0, window_bounds = array<i64: 1, 200, 128>}, {transform_indices = @transform_1, window_bounds = array<i64: 1152, 128>}, {transform_indices = @transform_2, window_bounds = array<i64: 1, 128>}, {transform_indices = @transform_3, window_bounds = array<i64: 1, 128>}, {transform_indices = @transform_4, window_bounds = array<i64: 1, 160, 128>}]} {
    %c0 = arith.constant 0 : index
    %c0_0 = arith.constant 0 : index
    %c0_1 = arith.constant 0 : index
    %0 = vector.load %arg2[%c0, %c0_0, %c0_1] : memref<1x200x128xbf16, #tpu.memory_space<vmem>>, vector<1x192x128xbf16>
    %1 = vector.shape_cast %0 : vector<1x192x128xbf16> to vector<192x128xbf16>
    %c0_2 = arith.constant 0 : index
    %c1 = arith.constant 1 : index
    %c0_3 = arith.constant 0 : index
    %2 = vector.load %arg2[%c0_2, %c1, %c0_3] : memref<1x200x128xbf16, #tpu.memory_space<vmem>>, vector<1x192x128xbf16>
    %3 = vector.shape_cast %2 : vector<1x192x128xbf16> to vector<192x128xbf16>
    %c0_4 = arith.constant 0 : index
    %c2 = arith.constant 2 : index
    %c0_5 = arith.constant 0 : index
    %4 = vector.load %arg2[%c0_4, %c2, %c0_5] : memref<1x200x128xbf16, #tpu.memory_space<vmem>>, vector<1x192x128xbf16>
    %5 = vector.shape_cast %4 : vector<1x192x128xbf16> to vector<192x128xbf16>
    %6 = tpu.concatenate %1, %3, %5 in 1 : vector<192x128xbf16>, vector<192x128xbf16>, vector<192x128xbf16> -> vector<192x384xbf16>
    %cst = arith.constant 0.000000e+00 : f32
    %7 = vector.broadcast %cst : f32 to vector<160x128xf32>
    %8 = vector.extract_strided_slice %6 {offsets = [0, 0], sizes = [160, 384], strides = [1, 1]} : vector<192x384xbf16> to vector<160x384xbf16>
    %c0_6 = arith.constant 0 : index
    %c0_7 = arith.constant 0 : index
    %9 = vector.load %arg3[%c0_6, %c0_7] : memref<1152x128xbf16, #tpu.memory_space<vmem>>, vector<384x128xbf16>
    %cst_8 = arith.constant dense<0.000000e+00> : vector<160x128xf32>
    %10 = tpu.matmul %8, %9, %cst_8 {dimension_numbers = #tpu.dot_dimension_numbers<[1], [0], [0], [1], [0, 0, 1, 1], [], []>} : vector<160x384xbf16>, vector<384x128xbf16>, vector<160x128xf32> -> vector<160x128xf32>
    %11 = arith.addf %7, %10 : vector<160x128xf32>
    %12 = vector.extract_strided_slice %6 {offsets = [16, 0], sizes = [160, 384], strides = [1, 1]} : vector<192x384xbf16> to vector<160x384xbf16>
    %c384 = arith.constant 384 : index
    %c0_9 = arith.constant 0 : index
    %13 = vector.load %arg3[%c384, %c0_9] : memref<1152x128xbf16, #tpu.memory_space<vmem>>, vector<384x128xbf16>
    %cst_10 = arith.constant dense<0.000000e+00> : vector<160x128xf32>
    %14 = tpu.matmul %12, %13, %cst_10 {dimension_numbers = #tpu.dot_dimension_numbers<[1], [0], [0], [1], [0, 0, 1, 1], [], []>} : vector<160x384xbf16>, vector<384x128xbf16>, vector<160x128xf32> -> vector<160x128xf32>
    %15 = arith.addf %11, %14 : vector<160x128xf32>
    %16 = vector.extract_strided_slice %6 {offsets = [32, 0], sizes = [160, 384], strides = [1, 1]} : vector<192x384xbf16> to vector<160x384xbf16>
    %c768 = arith.constant 768 : index
    %c0_11 = arith.constant 0 : index
    %17 = vector.load %arg3[%c768, %c0_11] : memref<1152x128xbf16, #tpu.memory_space<vmem>>, vector<384x128xbf16>
    %cst_12 = arith.constant dense<0.000000e+00> : vector<160x128xf32>
    %18 = tpu.matmul %16, %17, %cst_12 {dimension_numbers = #tpu.dot_dimension_numbers<[1], [0], [0], [1], [0, 0, 1, 1], [], []>} : vector<160x384xbf16>, vector<384x128xbf16>, vector<160x128xf32> -> vector<160x128xf32>
    %19 = arith.addf %15, %18 : vector<160x128xf32>
    %c0_13 = arith.constant 0 : index
    %c0_14 = arith.constant 0 : index
    %20 = vector.load %arg4[%c0_13, %c0_14] : memref<1x128xf32, #tpu.memory_space<vmem>>, vector<1x128xf32>
    %21 = vector.broadcast %20 : vector<1x128xf32> to vector<160x128xf32>
    %22 = arith.mulf %19, %21 : vector<160x128xf32>
    %c0_15 = arith.constant 0 : index
    %c0_16 = arith.constant 0 : index
    %23 = vector.load %arg5[%c0_15, %c0_16] : memref<1x128xf32, #tpu.memory_space<vmem>>, vector<1x128xf32>
    %24 = vector.broadcast %23 : vector<1x128xf32> to vector<160x128xf32>
    %25 = arith.addf %22, %24 : vector<160x128xf32>
    %cst_17 = arith.constant 0.000000e+00 : f32
    %26 = vector.broadcast %cst_17 : f32 to vector<160x128xf32>
    %27 = arith.cmpf oge, %25, %26 : vector<160x128xf32>
    %cst_18 = arith.constant 0.00999999977 : f32
    %28 = vector.broadcast %cst_18 : f32 to vector<160x128xf32>
    %29 = arith.mulf %28, %25 : vector<160x128xf32>
    %30 = arith.select %27, %25, %29 : vector<160x128xi1>, vector<160x128xf32>
    %31 = tpu.iota {dimensions = array<i32: 0>} : vector<160x128xi32>
    %c16_i32 = arith.constant 16 : i32
    %32 = vector.broadcast %c16_i32 : i32 to vector<160x128xi32>
    %33 = arith.cmpi sge, %31, %32 : vector<160x128xi32>
    %c144_i32 = arith.constant 144 : i32
    %34 = vector.broadcast %c144_i32 : i32 to vector<160x128xi32>
    %35 = arith.cmpi slt, %31, %34 : vector<160x128xi32>
    %36 = arith.andi %33, %35 : vector<160x128xi1>
    %c15_i32 = arith.constant 15 : i32
    %37 = vector.broadcast %c15_i32 : i32 to vector<160x128xi32>
    %38 = arith.andi %31, %37 : vector<160x128xi32>
    %c1_i32 = arith.constant 1 : i32
    %39 = vector.broadcast %c1_i32 : i32 to vector<160x128xi32>
    %40 = arith.cmpi sge, %38, %39 : vector<160x128xi32>
    %c8_i32 = arith.constant 8 : i32
    %41 = vector.broadcast %c8_i32 : i32 to vector<160x128xi32>
    %42 = arith.cmpi sle, %38, %41 : vector<160x128xi32>
    %43 = arith.andi %40, %42 : vector<160x128xi1>
    %44 = arith.andi %36, %43 : vector<160x128xi1>
    %cst_19 = arith.constant 0.000000e+00 : f32
    %45 = vector.broadcast %cst_19 : f32 to vector<160x128xf32>
    %46 = arith.select %44, %30, %45 : vector<160x128xi1>, vector<160x128xf32>
    %47 = arith.truncf %46 : vector<160x128xf32> to vector<160x128xbf16>
    %c0_20 = arith.constant 0 : index
    %c0_21 = arith.constant 0 : index
    %c0_22 = arith.constant 0 : index
    %48 = vector.load %arg6[%c0_20, %c0_21, %c0_22] : memref<1x160x128xbf16, #tpu.memory_space<vmem>>, vector<1x160x128xbf16>
    %49 = vector.shape_cast %48 : vector<1x160x128xbf16> to vector<160x128xbf16>
    %50 = vector.shape_cast %47 : vector<160x128xbf16> to vector<1x160x128xbf16>
    tpu.vector_store %arg6[%c0_20, %c0_21, %c0_22], %50 {strides = array<i32>} : memref<1x160x128xbf16, #tpu.memory_space<vmem>>, vector<1x160x128xbf16>,
    return
  }
  func.func @transform_0(%arg0: i32, %arg1: i32) -> (i32, i32, i32) {
    %c0_i32 = arith.constant 0 : i32
    %c0_i32_0 = arith.constant 0 : i32
    %c0_i32_1 = arith.constant 0 : i32
    return %arg0, %c0_i32, %c0_i32_0 : i32, i32, i32
  }
  func.func @transform_1(%arg0: i32, %arg1: i32) -> (i32, i32) {
    %c0_i32 = arith.constant 0 : i32
    %c0_i32_0 = arith.constant 0 : i32
    return %c0_i32, %arg1 : i32, i32
  }
  func.func @transform_2(%arg0: i32, %arg1: i32) -> (i32, i32) {
    %c0_i32 = arith.constant 0 : i32
    %c0_i32_0 = arith.constant 0 : i32
    return %c0_i32, %arg1 : i32, i32
  }
  func.func @transform_3(%arg0: i32, %arg1: i32) -> (i32, i32) {
    %c0_i32 = arith.constant 0 : i32
    %c0_i32_0 = arith.constant 0 : i32
    return %c0_i32, %arg1 : i32, i32
  }
  func.func @transform_4(%arg0: i32, %arg1: i32) -> (i32, i32, i32) {
    %c0_i32 = arith.constant 0 : i32
    %c0_i32_0 = arith.constant 0 : i32
    return %arg0, %c0_i32, %arg1 : i32, i32, i32
  }
}

</mosaic_0001>

<llo_original>
// kernel: tpu_custom_call.1
$region0: #{tpu_custom_call.1}
  #allocation0 [shape = 'u32[]', space=smem, size = 0x4, offset = 0x4, fixed_abs, tag = 'smem constant byte address 0x4 - core index']
  #allocation1 [shape = 'u32[144,128]{1,0:T(1,128)}', space=vmem, size = 0x12000, scoped, tag = 'internal scratch']
  %s0 = inlined_call_operand.hbm [shape: bf16[2,200,128], index: 0, kind: input, shape index: {}]
  %s1 = inlined_call_operand.hbm [shape: bf16[1152,128], index: 1, kind: input, shape index: {}]
  %s2 = inlined_call_operand.vmem [shape: f32[1,128], index: 2, kind: input, shape index: {}]
  %s3 = inlined_call_operand.vmem [shape: f32[1,128], index: 3, kind: input, shape index: {}]
  %s4 = inlined_call_operand.hbm [shape: bf16[2,160,128], index: 4, kind: output, shape index: {}]
  %s5 = sld [smem:[#allocation0]]
  $region57: #{tpu_custom_call.1} parent=0
    _
  %s7 = ssub.s32 1, %s5
  %s8 = scalar_select 0, %s7, %s5
  $region1: #{tpu_custom_call.1} parent=0
    #allocation2 [shape = 'u8[102400]{0}', space=vmem, size = 0x19000, scoped, tag = 'input window, operand 0']
    #allocation3 [shape = 's32[2]{0}', space=sflag, size = 0x8, scoped, tag = 'scoped memory for tpu_custom_call.1']
    #allocation4 [shape = 's32[2]{0}', space=sflag, size = 0x8, scoped, tag = 'scoped memory for tpu_custom_call.1']
    #allocation5 [shape = 'u8[294912]{0}', space=vmem, size = 0x48000, scoped, tag = 'input window, operand 1, single buffered']
    #allocation6 [shape = 's32[1]{0}', space=sflag, size = 0x4, scoped, tag = 'scoped memory for tpu_custom_call.1']
    #allocation7 [shape = 'u8[81920]{0}', space=vmem, size = 0x14000, scoped, tag = 'output window, operand 0']
    %9 = vsyncpa [#allocation3], 0
    %s10 = scalar_lea.sflag [#allocation3], 1
    %11 = vsyncpa %s10, 0
    %12 = vsyncpa [#allocation6], 0
    %13 = vsyncpa [#allocation4], 0
    %s14 = scalar_lea.sflag [#allocation4], 1
    %15 = vsyncpa %s14, 0
    loop: start=0, step=1, limit=4
    $region2: #{tpu_custom_call.1} parent=1 // loop_pre_header
      _
    $region3: #{tpu_custom_call.1} parent=1 // loop_header
      %s17 = sphi 0, %s21
      %p18 = scmp.ge.s32.totalorder %s17, 4
      %s24 = sphi 0, %s36
      %s25 = sphi 0, %s32
      %s26 = sphi 0, %s24
      %s27 = sphi 0, %s25
      %s28 = sphi 0, %s26
      %s29 = sphi 0, %s27
      %s39 = sphi 0, %s41
      %s42 = sphi 0, %s39
      %s43 = sphi 0, %s42
      %s59 = sphi 0, %s43
      %s65 = sphi 0, %s67
      %s68 = sphi 0, %s65
      %s69 = sphi 0, %s68
      %s85 = sphi 0, %s69
      %s91 = sphi 0, %s93
      %s94 = sphi 0, %s91
      %s95 = sphi 0, %s94
      %s111 = sphi 0, %s95
      %s117 = sphi 0, %s119
      %s120 = sphi 0, %s117
      %s121 = sphi 0, %s120
      %s137 = sphi 0, %s121
      %s145 = sphi 0, %s147
      %s148 = sphi 0, %s145
      %s149 = sphi 0, %s148
      %s165 = sphi 0, %s149
    $region4: #{tpu_custom_call.1} parent=1 // loop_header_branch
      %20 = sbr.rel (%p18) target = $region8
    $region5: #{tpu_custom_call.1} parent=1 // loop_body
      %s22 = ssub.s32 %s17, 1
      %s23 = ssub.s32 %s17, 2
      %s30 = sadd.s32 1, %s25
      %p31 = scmp.ge.s32.totalorder %s30, 1
      %s32 = scalar_select %p31, 0, %s30
      %s33 = sadd.s32 1, %s24
      %s34 = scalar_select %p31, %s33, %s24
      %p35 = scmp.ge.s32.totalorder %s34, 2
      %s36 = scalar_select %p35, 0, %s34
      %s37 = ssub.s32 %s24, %s36
      %p38 = scmp.eq.s32.totalorder %s37, 0
      %s40 = sadd.s32 %s39, 1
      %s41 = scalar_select %p38, %s39, %s40
      %p44 = pneg %p38
      %p45 = scmp.eq.s32.totalorder %s17, 1
      %p46 = por %p44, %p45
      %p47 = scmp.ne.s32.totalorder %s39, %s42
      %p48 = scmp.eq.s32.totalorder %s17, 0
      %p49 = por %p47, %p48
      %p50 = scmp.ne.s32.totalorder %s39, %s42
      %p51 = scmp.eq.s32.totalorder %s22, 1
      %p52 = por %p50, %p51
      %p53 = scmp.ne.s32.totalorder %s42, %s43
      %p54 = scmp.eq.s32.totalorder %s22, 0
      %p55 = por %p53, %p54
      %p56 = scmp.ne.s32.totalorder %s42, %s43
      %p57 = scmp.eq.s32.totalorder %s23, 1
      %p58 = por %p56, %p57
      %p60 = scmp.ne.s32.totalorder %s43, %s59
      %p61 = scmp.eq.s32.totalorder %s23, 0
      %p62 = por %p60, %p61
      %s63 = ssub.s32 %s25, %s32
      %p64 = scmp.eq.s32.totalorder %s63, 0
      %s66 = sadd.s32 %s65, 1
      %s67 = scalar_select %p64, %s65, %s66
      %p70 = pneg %p64
      %p71 = scmp.eq.s32.totalorder %s17, 1
      %p72 = por %p70, %p71
      %p73 = scmp.ne.s32.totalorder %s65, %s68
      %p74 = scmp.eq.s32.totalorder %s17, 0
      %p75 = por %p73, %p74
      %p76 = scmp.ne.s32.totalorder %s65, %s68
      %p77 = scmp.eq.s32.totalorder %s22, 1
      %p78 = por %p76, %p77
      %p79 = scmp.ne.s32.totalorder %s68, %s69
      %p80 = scmp.eq.s32.totalorder %s22, 0
      %p81 = por %p79, %p80
      %p82 = scmp.ne.s32.totalorder %s68, %s69
      %p83 = scmp.eq.s32.totalorder %s23, 1
      %p84 = por %p82, %p83
      %p86 = scmp.ne.s32.totalorder %s69, %s85
      %p87 = scmp.eq.s32.totalorder %s23, 0
      %p88 = por %p86, %p87
      %s89 = ssub.s32 %s25, %s32
      %p90 = scmp.eq.s32.totalorder %s89, 0
      %s92 = sadd.s32 %s91, 1
      %s93 = scalar_select %p90, %s91, %s92
      %p96 = pneg %p90
      %p97 = scmp.eq.s32.totalorder %s17, 1
      %p98 = por %p96, %p97
      %p99 = scmp.ne.s32.totalorder %s91, %s94
      %p100 = scmp.eq.s32.totalorder %s17, 0
      %p101 = por %p99, %p100
      %p102 = scmp.ne.s32.totalorder %s91, %s94
      %p103 = scmp.eq.s32.totalorder %s22, 1
      %p104 = por %p102, %p103
      %p105 = scmp.ne.s32.totalorder %s94, %s95
      %p106 = scmp.eq.s32.totalorder %s22, 0
      %p107 = por %p105, %p106
      %p108 = scmp.ne.s32.totalorder %s94, %s95
      %p109 = scmp.eq.s32.totalorder %s23, 1
      %p110 = por %p108, %p109
      %p112 = scmp.ne.s32.totalorder %s95, %s111
      %p113 = scmp.eq.s32.totalorder %s23, 0
      %p114 = por %p112, %p113
      %s115 = ssub.s32 %s25, %s32
      %p116 = scmp.eq.s32.totalorder %s115, 0
      %s118 = sadd.s32 %s117, 1
      %s119 = scalar_select %p116, %s117, %s118
      %p122 = pneg %p116
      %p123 = scmp.eq.s32.totalorder %s17, 1
      %p124 = por %p122, %p123
      %p125 = scmp.ne.s32.totalorder %s117, %s120
      %p126 = scmp.eq.s32.totalorder %s17, 0
      %p127 = por %p125, %p126
      %p128 = scmp.ne.s32.totalorder %s117, %s120
      %p129 = scmp.eq.s32.totalorder %s22, 1
      %p130 = por %p128, %p129
      %p131 = scmp.ne.s32.totalorder %s120, %s121
      %p132 = scmp.eq.s32.totalorder %s22, 0
      %p133 = por %p131, %p132
      %p134 = scmp.ne.s32.totalorder %s120, %s121
      %p135 = scmp.eq.s32.totalorder %s23, 1
      %p136 = por %p134, %p135
      %p138 = scmp.ne.s32.totalorder %s121, %s137
      %p139 = scmp.eq.s32.totalorder %s23, 0
      %p140 = por %p138, %p139
      %s141 = ssub.s32 %s24, %s36
      %s142 = ssub.s32 %s25, %s32
      %s143 = sor.u32 %s141, %s142
      %p144 = scmp.eq.s32.totalorder %s143, 0
      %s146 = sadd.s32 %s145, 1
      %s147 = scalar_select %p144, %s145, %s146
      %p150 = pneg %p144
      %p151 = scmp.eq.s32.totalorder %s17, 1
      %p152 = por %p150, %p151
      %p153 = scmp.ne.s32.totalorder %s145, %s148
      %p154 = scmp.eq.s32.totalorder %s17, 0
      %p155 = por %p153, %p154
      %p156 = scmp.ne.s32.totalorder %s145, %s148
      %p157 = scmp.eq.s32.totalorder %s22, 1
      %p158 = por %p156, %p157
      %p159 = scmp.ne.s32.totalorder %s148, %s149
      %p160 = scmp.eq.s32.totalorder %s22, 0
      %p161 = por %p159, %p160
      %p162 = scmp.ne.s32.totalorder %s148, %s149
      %p163 = scmp.eq.s32.totalorder %s23, 1
      %p164 = por %p162, %p163
      %p166 = scmp.ne.s32.totalorder %s149, %s165
      %p167 = scmp.eq.s32.totalorder %s23, 0
      %p168 = por %p166, %p167
      %p169 = scmp.le.s32.totalorder 1, %s17
      %p170 = scmp.lt.s32.totalorder %s17, 3
      %p171 = pnand %p169, %p170
      %p172 = pneg %p171
      // Predicated region
      $region9: #{tpu_custom_call.1} parent=5 // pred_check
        _
      $region10: #{tpu_custom_call.1} parent=5 // pred_check_branch
        %174 = sbr.rel (%p171) target = $region12
      $region11: #{tpu_custom_call.1} parent=5 // pred_region
        %s175 = ssub.s32 %s17, 1
        // Predicated region
        $region13: #{tpu_custom_call.1} parent=11 // pred_check
          %p176 = pneg %p81
        $region14: #{tpu_custom_call.1} parent=11 // pred_check_branch
          %178 = sbr.rel (%p176) target = $region16
        $region15: #{tpu_custom_call.1} parent=11 // pred_region
          %s180 = ssub.s32 9216, 9216
          %181 = vsyncadd [#allocation6], %s180
          %s182 = smul.addr %s27, 64
          %s183 = scalar_lea.hbm %s1, %s182
          %s184 = sshll.u32 [#allocation5], 4
          %s185 = int_to_ptr.vmem [resolvable:$true] %s184
          %190 = dma.hbm_to_vmem [thread:$0]  %s183, 9216, %s185, [#allocation6], 64, 64, 4
        $region16: #{tpu_custom_call.1} parent=11 // pred_fallthru
          _
        // Predicated region
        $region17: #{tpu_custom_call.1} parent=11 // pred_check
          %p191 = pneg %p107
        $region18: #{tpu_custom_call.1} parent=11 // pred_check_branch
          %193 = sbr.rel (%p191) target = $region20
        $region19: #{tpu_custom_call.1} parent=11 // pred_region
          %p194 = scmp.lt.s32.totalorder %s27, 0
          %s195 = scalar_select %p194, %s27, 0
          %s196 = scalar_lea.vmem %s2, %s195
        $region20: #{tpu_custom_call.1} parent=11 // pred_fallthru
          _
        // Predicated region
        $region21: #{tpu_custom_call.1} parent=11 // pred_check
          %p197 = pneg %p133
        $region22: #{tpu_custom_call.1} parent=11 // pred_check_branch
          %199 = sbr.rel (%p197) target = $region24
        $region23: #{tpu_custom_call.1} parent=11 // pred_region
          %p200 = scmp.lt.s32.totalorder %s27, 0
          %s201 = scalar_select %p200, %s27, 0
          %s202 = scalar_lea.vmem %s3, %s201
        $region24: #{tpu_custom_call.1} parent=11 // pred_fallthru
          _
      $region12: #{tpu_custom_call.1} parent=5 // pred_fallthru
        _
      %p203 = scmp.lt.s32.totalorder %s17, 2
      // Predicated region
      $region25: #{tpu_custom_call.1} parent=5 // pred_check
        %p204 = pneg %p203
      $region26: #{tpu_custom_call.1} parent=5 // pred_check_branch
        %206 = sbr.rel (%p204) target = $region28
      $region27: #{tpu_custom_call.1} parent=5 // pred_region
        // Predicated region
        $region29: #{tpu_custom_call.1} parent=27 // pred_check
          %p207 = pneg %p49
        $region30: #{tpu_custom_call.1} parent=27 // pred_check_branch
          %209 = sbr.rel (%p207) target = $region32
        $region31: #{tpu_custom_call.1} parent=27 // pred_region
          %s210 = sand.u32 %s39, 1
          %s211 = scalar_lea.sflag [#allocation3], %s210
          %s212 = sand.u32 %s39, 1
          %s213 = smul.addr %s212, 100
          %s214 = scalar_lea.vmem [#allocation2], %s213
          %s216 = ssub.s32 1600, 1600
          %217 = vsyncadd %s211, %s216
          %s218 = smul.addr %s24, 25
          %s219 = smul.addr %s218, 64
          %s220 = scalar_lea.hbm %s0, %s219
          %s221 = sshll.u32 %s214, 4
          %s222 = int_to_ptr.vmem [resolvable:$true] %s221
          %227 = dma.hbm_to_vmem [thread:$0]  %s220, 1600, %s222, %s211, 64, 64, 4
        $region32: #{tpu_custom_call.1} parent=27 // pred_fallthru
          _
      $region28: #{tpu_custom_call.1} parent=5 // pred_fallthru
        _
      %p228 = scmp.le.s32.totalorder 1, %s17
      %p229 = scmp.lt.s32.totalorder %s17, 3
      %p230 = pnand %p228, %p229
      %p231 = pneg %p230
      // Predicated region
      $region33: #{tpu_custom_call.1} parent=5 // pred_check
        _
      $region34: #{tpu_custom_call.1} parent=5 // pred_check_branch
        %233 = sbr.rel (%p230) target = $region36
      $region35: #{tpu_custom_call.1} parent=5 // pred_region
        %s234 = ssub.s32 %s17, 1
        %s235 = sand.u32 %s42, 1
        %s236 = scalar_lea.sflag [#allocation3], %s235
        %s237 = sand.u32 %s42, 1
        %s238 = smul.addr %s237, 100
        %s239 = scalar_lea.vmem [#allocation2], %s238
        // Predicated region
        $region37: #{tpu_custom_call.1} parent=35 // pred_check
          %p240 = pneg %p55
        $region38: #{tpu_custom_call.1} parent=35 // pred_check_branch
          %242 = sbr.rel (%p240) target = $region40
        $region39: #{tpu_custom_call.1} parent=35 // pred_region
          %243 = dma.done %s236, 1600
        $region40: #{tpu_custom_call.1} parent=35 // pred_fallthru
          _
        // Predicated region
        $region41: #{tpu_custom_call.1} parent=35 // pred_check
          %p244 = pneg %p81
        $region42: #{tpu_custom_call.1} parent=35 // pred_check_branch
          %246 = sbr.rel (%p244) target = $region44
        $region43: #{tpu_custom_call.1} parent=35 // pred_region
          %247 = dma.done [#allocation6], 9216
        $region44: #{tpu_custom_call.1} parent=35 // pred_fallthru
          _
        %s248 = sand.u32 %s42, 1
        %s249 = scalar_lea.sflag [#allocation3], %s248
        %s250 = sand.u32 %s42, 1
        %s251 = smul.addr %s250, 100
        %s252 = scalar_lea.vmem [#allocation2], %s251
        %p253 = pneg %p55
        %p254 = pneg %p52
        %p255 = pneg %p81
        %p256 = pneg %p78
        %p257 = scmp.lt.s32.totalorder %s27, 0
        %s258 = scalar_select %p257, %s27, 0
        %s259 = scalar_lea.vmem %s2, %s258
        %p260 = pneg %p107
        %p261 = pneg %p104
        %p262 = scmp.lt.s32.totalorder %s27, 0
        %s263 = scalar_select %p262, %s27, 0
        %s264 = scalar_lea.vmem %s3, %s263
        %p265 = pneg %p133
        %p266 = pneg %p130
        %p267 = pneg %p161
        %p268 = pneg %p158
        %s269 = sand.u32 %s148, 1
        %s270 = scalar_lea.sflag [#allocation4], %s269
        %s271 = sand.u32 %s148, 1
        %s272 = smul.addr %s271, 80
        %s273 = scalar_lea.vmem [#allocation7], %s272
        %p274 = scmp.lt.s32.totalorder %s27, 0
        %s275 = scalar_select %p274, %s27, 0
        %s276 = scalar_lea.vmem %s2, %s275
        %p277 = scmp.lt.s32.totalorder %s27, 0
        %s278 = scalar_select %p277, %s27, 0
        %s279 = scalar_lea.vmem %s3, %s278
        %v281 = vld [vmem:[%s239] sm:$0xf]
        %v282 = vld [vmem:[%s239 + $0x4] sm:$0xf]
        %v283 = vld [vmem:[%s239 + $0x8] sm:$0xf]
        %v284 = vld [vmem:[%s239 + $0xc] sm:$0xf]
        %v285 = vld [vmem:[%s239 + $0x10] sm:$0xf]
        %v286 = vld [vmem:[%s239 + $0x14] sm:$0xf]
        %v287 = vld [vmem:[%s239 + $0x18] sm:$0xf]
        %v288 = vld [vmem:[%s239 + $0x1c] sm:$0xf]
        %v289 = vld [vmem:[%s239 + $0x20] sm:$0xf]
        %v290 = vld [vmem:[%s239 + $0x24] sm:$0xf]
        %v291 = vld [vmem:[%s239 + $0x28] sm:$0xf]
        %v292 = vld [vmem:[%s239 + $0x2c] sm:$0xf]
        %v293 = vld [vmem:[%s239 + $0x30] sm:$0xf]
        %v294 = vld [vmem:[%s239 + $0x34] sm:$0xf]
        %v295 = vld [vmem:[%s239 + $0x38] sm:$0xf]
        %v296 = vld [vmem:[%s239 + $0x3c] sm:$0xf]
        %v297 = vld [vmem:[%s239 + $0x40] sm:$0xf]
        %v298 = vld [vmem:[%s239 + $0x44] sm:$0xf]
        %v299 = vld [vmem:[%s239 + $0x48] sm:$0xf]
        %v300 = vld [vmem:[%s239 + $0x4c] sm:$0xf]
        %v301 = vld [vmem:[%s239 + $0x50] sm:$0xf]
        %v302 = vld [vmem:[%s239 + $0x54] sm:$0xf]
        %v303 = vld [vmem:[%s239 + $0x58] sm:$0xf]
        %v304 = vld [vmem:[%s239 + $0x5c] sm:$0xf]
        %v305 = vld [vmem:[%s239] sm:$0xf]
        %v306 = vld [vmem:[%s239 + $0x4] sm:$0xf]
        %v307 = vld [vmem:[%s239 + $0x8] sm:$0xf]
        %v308 = vld [vmem:[%s239 + $0xc] sm:$0xf]
        %v309 = vld [vmem:[%s239 + $0x10] sm:$0xf]
        %v310 = vld [vmem:[%s239 + $0x14] sm:$0xf]
        %v311 = vld [vmem:[%s239 + $0x18] sm:$0xf]
        %v312 = vld [vmem:[%s239 + $0x1c] sm:$0xf]
        %v313 = vld [vmem:[%s239 + $0x20] sm:$0xf]
        %v314 = vld [vmem:[%s239 + $0x24] sm:$0xf]
        %v315 = vld [vmem:[%s239 + $0x28] sm:$0xf]
        %v316 = vld [vmem:[%s239 + $0x2c] sm:$0xf]
        %v317 = vld [vmem:[%s239 + $0x30] sm:$0xf]
        %v318 = vld [vmem:[%s239 + $0x34] sm:$0xf]
        %v319 = vld [vmem:[%s239 + $0x38] sm:$0xf]
        %v320 = vld [vmem:[%s239 + $0x3c] sm:$0xf]
        %v321 = vld [vmem:[%s239 + $0x40] sm:$0xf]
        %v322 = vld [vmem:[%s239 + $0x44] sm:$0xf]
        %v323 = vld [vmem:[%s239 + $0x48] sm:$0xf]
        %v324 = vld [vmem:[%s239 + $0x4c] sm:$0xf]
        %v325 = vld [vmem:[%s239 + $0x50] sm:$0xf]
        %v326 = vld [vmem:[%s239 + $0x54] sm:$0xf]
        %v327 = vld [vmem:[%s239 + $0x58] sm:$0xf]
        %v328 = vld [vmem:[%s239 + $0x5c] sm:$0xf]
        %v329 = vld [vmem:[%s239 + $0x60] sm:$0x1]
        %v330 = vld [vmem:[%s239] sm:$0xe]
        %v355 = vunpack.c.l.b16 %v281
        %v356 = vunpack.c.l.b16 %v282
        %v357 = vunpack.c.l.b16 %v283
        %v358 = vunpack.c.l.b16 %v284
        %v359 = vunpack.c.l.b16 %v285
        %v360 = vunpack.c.l.b16 %v286
        %v361 = vunpack.c.l.b16 %v287
        %v362 = vunpack.c.l.b16 %v288
        %v363 = vunpack.c.l.b16 %v289
        %v364 = vunpack.c.l.b16 %v290
        %v365 = vunpack.c.l.b16 %v291
        %v366 = vunpack.c.l.b16 %v292
        %v367 = vunpack.c.l.b16 %v293
        %v368 = vunpack.c.l.b16 %v294
        %v369 = vunpack.c.l.b16 %v295
        %v370 = vunpack.c.l.b16 %v296
        %v371 = vunpack.c.l.b16 %v297
        %v372 = vunpack.c.l.b16 %v298
        %v373 = vunpack.c.l.b16 %v299
        %v374 = vunpack.c.l.b16 %v300
        %v375 = vunpack.c.l.b16 %v301
        %v376 = vunpack.c.l.b16 %v302
        %v377 = vunpack.c.l.b16 %v303
        %v378 = vunpack.c.l.b16 %v304
        %v379 = vpack.c.b16 %v356, %v355
        %v380 = vpack.c.b16 %v358, %v357
        %v381 = vpack.c.b16 %v360, %v359
        %v382 = vpack.c.b16 %v362, %v361
        %v383 = vpack.c.b16 %v364, %v363
        %v384 = vpack.c.b16 %v366, %v365
        %v385 = vpack.c.b16 %v368, %v367
        %v386 = vpack.c.b16 %v370, %v369
        %v387 = vpack.c.b16 %v372, %v371
        %v388 = vpack.c.b16 %v374, %v373
        %v389 = vpack.c.b16 %v376, %v375
        %v390 = vpack.c.b16 %v378, %v377
        %v428 = vunpack.c.l.b16 %v305
        %v429 = vunpack.c.l.b16 %v306
        %v430 = vunpack.c.l.b16 %v307
        %v431 = vunpack.c.l.b16 %v308
        %v432 = vunpack.c.l.b16 %v309
        %v433 = vunpack.c.l.b16 %v310
        %v434 = vunpack.c.l.b16 %v311
        %v435 = vunpack.c.l.b16 %v312
        %v436 = vunpack.c.l.b16 %v313
        %v437 = vunpack.c.l.b16 %v314
        %v438 = vunpack.c.l.b16 %v315
        %v439 = vunpack.c.l.b16 %v316
        %v440 = vunpack.c.l.b16 %v317
        %v441 = vunpack.c.l.b16 %v318
        %v442 = vunpack.c.l.b16 %v319
        %v443 = vunpack.c.l.b16 %v320
        %v444 = vunpack.c.l.b16 %v321
        %v445 = vunpack.c.l.b16 %v322
        %v446 = vunpack.c.l.b16 %v323
        %v447 = vunpack.c.l.b16 %v324
        %v448 = vunpack.c.l.b16 %v325
        %v449 = vunpack.c.l.b16 %v326
        %v450 = vunpack.c.l.b16 %v327
        %v451 = vunpack.c.l.b16 %v328
        %v452 = vunpack.c.l.b16 %v329
        %v453 = vpack.c.b16 %v429, %v428
        %v454 = vpack.c.b16 %v431, %v430
        %v455 = vpack.c.b16 %v433, %v432
        %v456 = vpack.c.b16 %v435, %v434
        %v457 = vpack.c.b16 %v437, %v436
        %v458 = vpack.c.b16 %v439, %v438
        %v459 = vpack.c.b16 %v441, %v440
        %v460 = vpack.c.b16 %v443, %v442
        %v461 = vpack.c.b16 %v445, %v444
        %v462 = vpack.c.b16 %v447, %v446
        %v463 = vpack.c.b16 %v449, %v448
        %v464 = vpack.c.b16 %v451, %v450
        %v465 = vpack.c.b16 %v452, %v452
        %vm466 = vsmask.f32 7424
        %v468 = vshrl.u32 %v453, 16
        %v470 = vshll.u32 %v453, 16
        %v472 = vrot.slane %v470, 1
        %v473 = vor.u32 %v468, %v472
        %v475 = vshll.u32 %v454, 16
        %v477 = vrot.slane %v475, 1
        %v478 = vsel %vm466, %v473, %v477
        %v479 = vshrl.u32 %v454, 16
        %v481 = vor.u32 %v479, %v477
        %v483 = vshll.u32 %v455, 16
        %v485 = vrot.slane %v483, 1
        %v486 = vsel %vm466, %v481, %v485
        %v487 = vshrl.u32 %v455, 16
        %v489 = vor.u32 %v487, %v485
        %v491 = vshll.u32 %v456, 16
        %v493 = vrot.slane %v491, 1
        %v494 = vsel %vm466, %v489, %v493
        %v495 = vshrl.u32 %v456, 16
        %v497 = vor.u32 %v495, %v493
        %v499 = vshll.u32 %v457, 16
        %v501 = vrot.slane %v499, 1
        %v502 = vsel %vm466, %v497, %v501
        %v503 = vshrl.u32 %v457, 16
        %v505 = vor.u32 %v503, %v501
        %v507 = vshll.u32 %v458, 16
        %v509 = vrot.slane %v507, 1
        %v510 = vsel %vm466, %v505, %v509
        %v511 = vshrl.u32 %v458, 16
        %v513 = vor.u32 %v511, %v509
        %v515 = vshll.u32 %v459, 16
        %v517 = vrot.slane %v515, 1
        %v518 = vsel %vm466, %v513, %v517
        %v519 = vshrl.u32 %v459, 16
        %v521 = vor.u32 %v519, %v517
        %v523 = vshll.u32 %v460, 16
        %v525 = vrot.slane %v523, 1
        %v526 = vsel %vm466, %v521, %v525
        %v527 = vshrl.u32 %v460, 16
        %v529 = vor.u32 %v527, %v525
        %v531 = vshll.u32 %v461, 16
        %v533 = vrot.slane %v531, 1
        %v534 = vsel %vm466, %v529, %v533
        %v535 = vshrl.u32 %v461, 16
        %v537 = vor.u32 %v535, %v533
        %v539 = vshll.u32 %v462, 16
        %v541 = vrot.slane %v539, 1
        %v542 = vsel %vm466, %v537, %v541
        %v543 = vshrl.u32 %v462, 16
        %v545 = vor.u32 %v543, %v541
        %v547 = vshll.u32 %v463, 16
        %v549 = vrot.slane %v547, 1
        %v550 = vsel %vm466, %v545, %v549
        %v551 = vshrl.u32 %v463, 16
        %v553 = vor.u32 %v551, %v549
        %v555 = vshll.u32 %v464, 16
        %v557 = vrot.slane %v555, 1
        %v558 = vsel %vm466, %v553, %v557
        %v559 = vshrl.u32 %v464, 16
        %v561 = vor.u32 %v559, %v557
        %v563 = vshll.u32 %v465, 16
        %v565 = vrot.slane %v563, 1
        %v566 = vsel %vm466, %v561, %v565
        %v580 = vunpack.c.l.b16 %v330
        %v581 = vpack.c.b16 %v429, %v580
        %vm582 = vcmask 1046528
        %v583 = vrot.slane %v581, 1
        %v584 = vrot.slane %v454, 1
        %v585 = vsel %vm582, %v583, %v584
        %v586 = vrot.slane %v455, 1
        %v587 = vsel %vm582, %v584, %v586
        %v588 = vrot.slane %v456, 1
        %v589 = vsel %vm582, %v586, %v588
        %v590 = vrot.slane %v457, 1
        %v591 = vsel %vm582, %v588, %v590
        %v592 = vrot.slane %v458, 1
        %v593 = vsel %vm582, %v590, %v592
        %v594 = vrot.slane %v459, 1
        %v595 = vsel %vm582, %v592, %v594
        %v596 = vrot.slane %v460, 1
        %v597 = vsel %vm582, %v594, %v596
        %v598 = vrot.slane %v461, 1
        %v599 = vsel %vm582, %v596, %v598
        %v600 = vrot.slane %v462, 1
        %v601 = vsel %vm582, %v598, %v600
        %v602 = vrot.slane %v463, 1
        %v603 = vsel %vm582, %v600, %v602
        %v604 = vrot.slane %v464, 1
        %v605 = vsel %vm582, %v602, %v604
        %v606 = vrot.slane %v465, 1
        %v607 = vsel %vm582, %v604, %v606
        %v620 = vld [vmem:[#allocation5] sm:$0xf]
        %v621 = vld [vmem:[#allocation5 + $0x4] sm:$0xf]
        %v622 = vld [vmem:[#allocation5 + $0x8] sm:$0xf]
        %v623 = vld [vmem:[#allocation5 + $0xc] sm:$0xf]
        %v624 = vld [vmem:[#allocation5 + $0x10] sm:$0xf]
        %v625 = vld [vmem:[#allocation5 + $0x14] sm:$0xf]
        %v626 = vld [vmem:[#allocation5 + $0x18] sm:$0xf]
        %v627 = vld [vmem:[#allocation5 + $0x1c] sm:$0xf]
        %v628 = vld [vmem:[#allocation5 + $0x20] sm:$0xf]
        %v629 = vld [vmem:[#allocation5 + $0x24] sm:$0xf]
        %v630 = vld [vmem:[#allocation5 + $0x28] sm:$0xf]
        %v631 = vld [vmem:[#allocation5 + $0x2c] sm:$0xf]
        %v632 = vld [vmem:[#allocation5 + $0x30] sm:$0xf]
        %v633 = vld [vmem:[#allocation5 + $0x34] sm:$0xf]
        %v634 = vld [vmem:[#allocation5 + $0x38] sm:$0xf]
        %v635 = vld [vmem:[#allocation5 + $0x3c] sm:$0xf]
        %v636 = vld [vmem:[#allocation5 + $0x40] sm:$0xf]
        %v637 = vld [vmem:[#allocation5 + $0x44] sm:$0xf]
        %v638 = vld [vmem:[#allocation5 + $0x48] sm:$0xf]
        %v639 = vld [vmem:[#allocation5 + $0x4c] sm:$0xf]
        %v640 = vld [vmem:[#allocation5 + $0x50] sm:$0xf]
        %v641 = vld [vmem:[#allocation5 + $0x54] sm:$0xf]
        %v642 = vld [vmem:[#allocation5 + $0x58] sm:$0xf]
        %v643 = vld [vmem:[#allocation5 + $0x5c] sm:$0xf]
        %v644 = vld [vmem:[#allocation5 + $0x60] sm:$0xf]
        %v645 = vld [vmem:[#allocation5 + $0x64] sm:$0xf]
        %v646 = vld [vmem:[#allocation5 + $0x68] sm:$0xf]
        %v647 = vld [vmem:[#allocation5 + $0x6c] sm:$0xf]
        %v648 = vld [vmem:[#allocation5 + $0x70] sm:$0xf]
        %v649 = vld [vmem:[#allocation5 + $0x74] sm:$0xf]
        %v650 = vld [vmem:[#allocation5 + $0x78] sm:$0xf]
        %v651 = vld [vmem:[#allocation5 + $0x7c] sm:$0xf]
        %v652 = vld [vmem:[#allocation5 + $0x80] sm:$0xf]
        %v653 = vld [vmem:[#allocation5 + $0x84] sm:$0xf]
        %v654 = vld [vmem:[#allocation5 + $0x88] sm:$0xf]
        %v655 = vld [vmem:[#allocation5 + $0x8c] sm:$0xf]
        %v656 = vld [vmem:[#allocation5 + $0x90] sm:$0xf]
        %v657 = vld [vmem:[#allocation5 + $0x94] sm:$0xf]
        %v658 = vld [vmem:[#allocation5 + $0x98] sm:$0xf]
        %v659 = vld [vmem:[#allocation5 + $0x9c] sm:$0xf]
        %v660 = vld [vmem:[#allocation5 + $0xa0] sm:$0xf]
        %v661 = vld [vmem:[#allocation5 + $0xa4] sm:$0xf]
        %v662 = vld [vmem:[#allocation5 + $0xa8] sm:$0xf]
        %v663 = vld [vmem:[#allocation5 + $0xac] sm:$0xf]
        %v664 = vld [vmem:[#allocation5 + $0xb0] sm:$0xf]
        %v665 = vld [vmem:[#allocation5 + $0xb4] sm:$0xf]
        %v666 = vld [vmem:[#allocation5 + $0xb8] sm:$0xf]
        %v667 = vld [vmem:[#allocation5 + $0xbc] sm:$0xf]
        %v668 = vld [vmem:[#allocation5 + $0xc0] sm:$0xf]
        %v669 = vld [vmem:[#allocation5 + $0xc4] sm:$0xf]
        %v670 = vld [vmem:[#allocation5 + $0xc8] sm:$0xf]
        %v671 = vld [vmem:[#allocation5 + $0xcc] sm:$0xf]
        %v672 = vld [vmem:[#allocation5 + $0xd0] sm:$0xf]
        %v673 = vld [vmem:[#allocation5 + $0xd4] sm:$0xf]
        %v674 = vld [vmem:[#allocation5 + $0xd8] sm:$0xf]
        %v675 = vld [vmem:[#allocation5 + $0xdc] sm:$0xf]
        %v676 = vld [vmem:[#allocation5 + $0xe0] sm:$0xf]
        %v677 = vld [vmem:[#allocation5 + $0xe4] sm:$0xf]
        %v678 = vld [vmem:[#allocation5 + $0xe8] sm:$0xf]
        %v679 = vld [vmem:[#allocation5 + $0xec] sm:$0xf]
        %v680 = vld [vmem:[#allocation5 + $0xf0] sm:$0xf]
        %v681 = vld [vmem:[#allocation5 + $0xf4] sm:$0xf]
        %v682 = vld [vmem:[#allocation5 + $0xf8] sm:$0xf]
        %v683 = vld [vmem:[#allocation5 + $0xfc] sm:$0xf]
        %v684 = vld [vmem:[#allocation5 + $0x100] sm:$0xf]
        %v685 = vld [vmem:[#allocation5 + $0x104] sm:$0xf]
        %v686 = vld [vmem:[#allocation5 + $0x108] sm:$0xf]
        %v687 = vld [vmem:[#allocation5 + $0x10c] sm:$0xf]
        %v688 = vld [vmem:[#allocation5 + $0x110] sm:$0xf]
        %v689 = vld [vmem:[#allocation5 + $0x114] sm:$0xf]
        %v690 = vld [vmem:[#allocation5 + $0x118] sm:$0xf]
        %v691 = vld [vmem:[#allocation5 + $0x11c] sm:$0xf]
        %v692 = vld [vmem:[#allocation5 + $0x120] sm:$0xf]
        %v693 = vld [vmem:[#allocation5 + $0x124] sm:$0xf]
        %v694 = vld [vmem:[#allocation5 + $0x128] sm:$0xf]
        %v695 = vld [vmem:[#allocation5 + $0x12c] sm:$0xf]
        %v696 = vld [vmem:[#allocation5 + $0x130] sm:$0xf]
        %v697 = vld [vmem:[#allocation5 + $0x134] sm:$0xf]
        %v698 = vld [vmem:[#allocation5 + $0x138] sm:$0xf]
        %v699 = vld [vmem:[#allocation5 + $0x13c] sm:$0xf]
        %v700 = vld [vmem:[#allocation5 + $0x140] sm:$0xf]
        %v701 = vld [vmem:[#allocation5 + $0x144] sm:$0xf]
        %v702 = vld [vmem:[#allocation5 + $0x148] sm:$0xf]
        %v703 = vld [vmem:[#allocation5 + $0x14c] sm:$0xf]
        %v704 = vld [vmem:[#allocation5 + $0x150] sm:$0xf]
        %v705 = vld [vmem:[#allocation5 + $0x154] sm:$0xf]
        %v706 = vld [vmem:[#allocation5 + $0x158] sm:$0xf]
        %v707 = vld [vmem:[#allocation5 + $0x15c] sm:$0xf]
        %v708 = vld [vmem:[#allocation5 + $0x160] sm:$0xf]
        %v709 = vld [vmem:[#allocation5 + $0x164] sm:$0xf]
        %v710 = vld [vmem:[#allocation5 + $0x168] sm:$0xf]
        %v711 = vld [vmem:[#allocation5 + $0x16c] sm:$0xf]
        %v712 = vld [vmem:[#allocation5 + $0x170] sm:$0xf]
        %v713 = vld [vmem:[#allocation5 + $0x174] sm:$0xf]
        %v714 = vld [vmem:[#allocation5 + $0x178] sm:$0xf]
        %v715 = vld [vmem:[#allocation5 + $0x17c] sm:$0xf]
        %v764 = vunpack.c.l.b16 %v668
        %v765 = vunpack.c.l.b16 %v669
        %v766 = vunpack.c.l.b16 %v670
        %v767 = vunpack.c.l.b16 %v671
        %v768 = vunpack.c.l.b16 %v672
        %v769 = vunpack.c.l.b16 %v673
        %v770 = vunpack.c.l.b16 %v674
        %v771 = vunpack.c.l.b16 %v675
        %v772 = vunpack.c.l.b16 %v676
        %v773 = vunpack.c.l.b16 %v677
        %v774 = vunpack.c.l.b16 %v678
        %v775 = vunpack.c.l.b16 %v679
        %v776 = vunpack.c.l.b16 %v680
        %v777 = vunpack.c.l.b16 %v681
        %v778 = vunpack.c.l.b16 %v682
        %v779 = vunpack.c.l.b16 %v683
        %v780 = vunpack.c.l.b16 %v684
        %v781 = vunpack.c.l.b16 %v685
        %v782 = vunpack.c.l.b16 %v686
        %v783 = vunpack.c.l.b16 %v687
        %v784 = vunpack.c.l.b16 %v688
        %v785 = vunpack.c.l.b16 %v689
        %v786 = vunpack.c.l.b16 %v690
        %v787 = vunpack.c.l.b16 %v691
        %v788 = vunpack.c.l.b16 %v692
        %v789 = vunpack.c.l.b16 %v693
        %v790 = vunpack.c.l.b16 %v694
        %v791 = vunpack.c.l.b16 %v695
        %v792 = vunpack.c.l.b16 %v696
        %v793 = vunpack.c.l.b16 %v697
        %v794 = vunpack.c.l.b16 %v698
        %v795 = vunpack.c.l.b16 %v699
        %v796 = vunpack.c.l.b16 %v700
        %v797 = vunpack.c.l.b16 %v701
        %v798 = vunpack.c.l.b16 %v702
        %v799 = vunpack.c.l.b16 %v703
        %v800 = vunpack.c.l.b16 %v704
        %v801 = vunpack.c.l.b16 %v705
        %v802 = vunpack.c.l.b16 %v706
        %v803 = vunpack.c.l.b16 %v707
        %v804 = vunpack.c.l.b16 %v708
        %v805 = vunpack.c.l.b16 %v709
        %v806 = vunpack.c.l.b16 %v710
        %v807 = vunpack.c.l.b16 %v711
        %v808 = vunpack.c.l.b16 %v712
        %v809 = vunpack.c.l.b16 %v713
        %v810 = vunpack.c.l.b16 %v714
        %v811 = vunpack.c.l.b16 %v715
        %v812 = vpack.c.b16 %v765, %v764
        %v813 = vpack.c.b16 %v767, %v766
        %v814 = vpack.c.b16 %v769, %v768
        %v815 = vpack.c.b16 %v771, %v770
        %v816 = vpack.c.b16 %v773, %v772
        %v817 = vpack.c.b16 %v775, %v774
        %v818 = vpack.c.b16 %v777, %v776
        %v819 = vpack.c.b16 %v779, %v778
        %v820 = vpack.c.b16 %v781, %v780
        %v821 = vpack.c.b16 %v783, %v782
        %v822 = vpack.c.b16 %v785, %v784
        %v823 = vpack.c.b16 %v787, %v786
        %v824 = vpack.c.b16 %v789, %v788
        %v825 = vpack.c.b16 %v791, %v790
        %v826 = vpack.c.b16 %v793, %v792
        %v827 = vpack.c.b16 %v795, %v794
        %v828 = vpack.c.b16 %v797, %v796
        %v829 = vpack.c.b16 %v799, %v798
        %v830 = vpack.c.b16 %v801, %v800
        %v831 = vpack.c.b16 %v803, %v802
        %v832 = vpack.c.b16 %v805, %v804
        %v833 = vpack.c.b16 %v807, %v806
        %v834 = vpack.c.b16 %v809, %v808
        %v835 = vpack.c.b16 %v811, %v810
        %860 = vmatprep.subr.bf16.mxu0 0
        %861 = vmatpush1.bf16.msra.mxu0 %v812
        %862 = vmatprep.subr.bf16.mxu0 0
        %863 = vmatpush1.bf16.msra.mxu0 %v813
        %864 = vmatprep.subr.bf16.mxu0 0
        %865 = vmatpush1.bf16.msra.mxu0 %v814
        %866 = vmatprep.subr.bf16.mxu0 0
        %867 = vmatpush1.bf16.msra.mxu0 %v815
        %868 = vmatprep.subr.bf16.mxu0 0
        %869 = vmatpush1.bf16.msra.mxu0 %v816
        %870 = vmatprep.subr.bf16.mxu0 0
        %871 = vmatpush1.bf16.msra.mxu0 %v817
        %872 = vmatprep.subr.bf16.mxu0 0
        %873 = vmatpush1.bf16.msra.mxu0 %v818
        %874 = vmatprep.subr.bf16.mxu0 0
        %875 = vmatpush1.bf16.msra.mxu0 %v819
        %876 = vmatprep.subr.bf16.mxu0 0
        %877 = vmatpush1.bf16.msra.mxu0 %v820
        %878 = vmatprep.subr.bf16.mxu0 0
        %879 = vmatpush1.bf16.msra.mxu0 %v821
        %880 = vmatprep.subr.bf16.mxu0 0
        %881 = vmatpush1.bf16.msra.mxu0 %v822
        %882 = vmatprep.subr.bf16.mxu0 0
        %883 = vmatpush1.bf16.msra.mxu0 %v823
        %884 = vmatprep.subr.bf16.mxu0 0
        %885 = vmatpush1.bf16.msra.mxu0 %v824
        %886 = vmatprep.subr.bf16.mxu0 0
        %887 = vmatpush1.bf16.msra.mxu0 %v825
        %888 = vmatprep.subr.bf16.mxu0 0
        %889 = vmatpush1.bf16.msra.mxu0 %v826
        %890 = vmatprep.subr.bf16.mxu0 0
        %891 = vmatpush1.bf16.msra.mxu0 %v827
        %892 = vmatprep.mubr.bf16.mxu0 %v486
        %893 = vmatmul.mubr.bf16.gmra.mrb[0].mxu0 %v380
        %v894 = vpop.f32.mrb[0].mxu0
        %v895 = vadd.f32 0.0, %v894
        %v896 = vpop.f32.mrb[0].mxu0
        %v897 = vpop.f32.mrb[0].mxu0
        %v898 = vadd.f32 0.0, %v897
        %v899 = vpop.f32.mrb[0].mxu0
        %900 = vmatprep.mubr.bf16.mxu0 %v494
        %901 = vmatmul.mubr.bf16.gmra.mrb[0].mxu0 %v381
        %v902 = vpop.f32.mrb[0].mxu0
        %v903 = vadd.f32 0.0, %v902
        %v904 = vpop.f32.mrb[0].mxu0
        %v905 = vpop.f32.mrb[0].mxu0
        %v906 = vadd.f32 0.0, %v905
        %v907 = vpop.f32.mrb[0].mxu0
        %908 = vmatprep.mubr.bf16.mxu0 %v502
        %909 = vmatmul.mubr.bf16.gmra.mrb[0].mxu0 %v382
        %v910 = vpop.f32.mrb[0].mxu0
        %v911 = vadd.f32 0.0, %v910
        %v912 = vpop.f32.mrb[0].mxu0
        %v913 = vpop.f32.mrb[0].mxu0
        %v914 = vadd.f32 0.0, %v913
        %v915 = vpop.f32.mrb[0].mxu0
        %916 = vmatprep.mubr.bf16.mxu0 %v510
        %917 = vmatmul.mubr.bf16.gmra.mrb[0].mxu0 %v383
        %v918 = vpop.f32.mrb[0].mxu0
        %v919 = vadd.f32 0.0, %v918
        %v920 = vpop.f32.mrb[0].mxu0
        %v921 = vpop.f32.mrb[0].mxu0
        %v922 = vadd.f32 0.0, %v921
        %v923 = vpop.f32.mrb[0].mxu0
        %924 = vmatprep.mubr.bf16.mxu0 %v518
        %925 = vmatmul.mubr.bf16.gmra.mrb[0].mxu0 %v384
        %v926 = vpop.f32.mrb[0].mxu0
        %v927 = vadd.f32 0.0, %v926
        %v928 = vpop.f32.mrb[0].mxu0
        %v929 = vpop.f32.mrb[0].mxu0
        %v930 = vadd.f32 0.0, %v929
        %v931 = vpop.f32.mrb[0].mxu0
        %932 = vmatprep.mubr.bf16.mxu0 %v526
        %933 = vmatmul.mubr.bf16.gmra.mrb[0].mxu0 %v385
        %v934 = vpop.f32.mrb[0].mxu0
        %v935 = vadd.f32 0.0, %v934
        %v936 = vpop.f32.mrb[0].mxu0
        %v937 = vpop.f32.mrb[0].mxu0
        %v938 = vadd.f32 0.0, %v937
        %v939 = vpop.f32.mrb[0].mxu0
        %940 = vmatprep.mubr.bf16.mxu0 %v534
        %941 = vmatmul.mubr.bf16.gmra.mrb[0].mxu0 %v386
        %v942 = vpop.f32.mrb[0].mxu0
        %v943 = vadd.f32 0.0, %v942
        %v944 = vpop.f32.mrb[0].mxu0
        %v945 = vpop.f32.mrb[0].mxu0
        %v946 = vadd.f32 0.0, %v945
        %v947 = vpop.f32.mrb[0].mxu0
        %948 = vmatprep.mubr.bf16.mxu0 %v542
        %949 = vmatmul.mubr.bf16.gmra.mrb[0].mxu0 %v387
        %v950 = vpop.f32.mrb[0].mxu0
        %v951 = vadd.f32 0.0, %v950
        %v952 = vpop.f32.mrb[0].mxu0
        %v953 = vpop.f32.mrb[0].mxu0
        %v954 = vadd.f32 0.0, %v953
        %v955 = vpop.f32.mrb[0].mxu0
        %956 = vmatprep.mubr.bf16.mxu0 %v550
        %957 = vmatmul.mubr.bf16.gmra.mrb[0].mxu0 %v388
        %v958 = vpop.f32.mrb[0].mxu0
        %v959 = vadd.f32 0.0, %v958
        %v960 = vpop.f32.mrb[0].mxu0
        %v961 = vpop.f32.mrb[0].mxu0
        %v962 = vadd.f32 0.0, %v961
        %v963 = vpop.f32.mrb[0].mxu0
        %964 = vmatprep.mubr.bf16.mxu0 %v558
        %965 = vmatmul.mubr.bf16.gmra.mrb[0].mxu0 %v389
        %v966 = vpop.f32.mrb[0].mxu0
        %v967 = vadd.f32 0.0, %v966
        %v968 = vpop.f32.mrb[0].mxu0
        %v969 = vpop.f32.mrb[0].mxu0
        %v970 = vadd.f32 0.0, %v969
        %v971 = vpop.f32.mrb[0].mxu0
        %972 = vdwg.mxu0
        %973 = vmatprep.subr.bf16.mxu0 0
        %974 = vmatpush1.bf16.msra.mxu0 %v828
        %975 = vmatprep.subr.bf16.mxu0 0
        %976 = vmatpush1.bf16.msra.mxu0 %v829
        %977 = vmatprep.subr.bf16.mxu0 0
        %978 = vmatpush1.bf16.msra.mxu0 %v830
        %979 = vmatprep.subr.bf16.mxu0 0
        %980 = vmatpush1.bf16.msra.mxu0 %v831
        %981 = vmatprep.subr.bf16.mxu0 0
        %982 = vmatpush1.bf16.msra.mxu0 %v832
        %983 = vmatprep.subr.bf16.mxu0 0
        %984 = vmatpush1.bf16.msra.mxu0 %v833
        %985 = vmatprep.subr.bf16.mxu0 0
        %986 = vmatpush1.bf16.msra.mxu0 %v834
        %987 = vmatprep.subr.bf16.mxu0 0
        %988 = vmatpush1.bf16.msra.mxu0 %v835
        %989 = vmatprep.subr.bf16.mxu0 0
        %990 = vmatpush1.bf16.msra.mxu0 0
        %991 = vmatprep.subr.bf16.mxu0 0
        %992 = vmatpush1.bf16.msra.mxu0 0
        %993 = vmatprep.subr.bf16.mxu0 0
        %994 = vmatpush1.bf16.msra.mxu0 0
        %995 = vmatprep.subr.bf16.mxu0 0
        %996 = vmatpush1.bf16.msra.mxu0 0
        %997 = vmatprep.subr.bf16.mxu0 0
        %998 = vmatpush1.bf16.msra.mxu0 0
        %999 = vmatprep.subr.bf16.mxu0 0
        %1000 = vmatpush1.bf16.msra.mxu0 0
        %1001 = vmatprep.subr.bf16.mxu0 0
        %1002 = vmatpush1.bf16.msra.mxu0 0
        %1003 = vmatprep.subr.bf16.mxu0 0
        %1004 = vmatpush1.bf16.msra.mxu0 0
        %1005 = vmatprep.mubr.bf16.mxu0 0
        %1006 = vmatmul.mubr.bf16.gmra.mrb[0].mxu0 %v587
        %v1007 = vpop.f32.mrb[0].mxu0
        %v1008 = vadd.f32 %v895, %v1007
        %v1009 = vpop.f32.mrb[0].mxu0
        %v1010 = vpop.f32.mrb[0].mxu0
        %v1011 = vadd.f32 %v898, %v1010
        %v1012 = vpop.f32.mrb[0].mxu0
        %1013 = vmatprep.mubr.bf16.mxu0 0
        %1014 = vmatmul.mubr.bf16.gmra.mrb[0].mxu0 %v589
        %v1015 = vpop.f32.mrb[0].mxu0
        %v1016 = vadd.f32 %v903, %v1015
        %v1017 = vpop.f32.mrb[0].mxu0
        %v1018 = vpop.f32.mrb[0].mxu0
        %v1019 = vadd.f32 %v906, %v1018
        %v1020 = vpop.f32.mrb[0].mxu0
        %1021 = vmatprep.mubr.bf16.mxu0 0
        %1022 = vmatmul.mubr.bf16.gmra.mrb[0].mxu0 %v591
        %v1023 = vpop.f32.mrb[0].mxu0
        %v1024 = vadd.f32 %v911, %v1023
        %v1025 = vpop.f32.mrb[0].mxu0
        %v1026 = vpop.f32.mrb[0].mxu0
        %v1027 = vadd.f32 %v914, %v1026
        %v1028 = vpop.f32.mrb[0].mxu0
        %1029 = vmatprep.mubr.bf16.mxu0 0
        %1030 = vmatmul.mubr.bf16.gmra.mrb[0].mxu0 %v593
        %v1031 = vpop.f32.mrb[0].mxu0
        %v1032 = vadd.f32 %v919, %v1031
        %v1033 = vpop.f32.mrb[0].mxu0
        %v1034 = vpop.f32.mrb[0].mxu0
        %v1035 = vadd.f32 %v922, %v1034
        %v1036 = vpop.f32.mrb[0].mxu0
        %1037 = vmatprep.mubr.bf16.mxu0 0
        %1038 = vmatmul.mubr.bf16.gmra.mrb[0].mxu0 %v595
        %v1039 = vpop.f32.mrb[0].mxu0
        %v1040 = vadd.f32 %v927, %v1039
        %v1041 = vpop.f32.mrb[0].mxu0
        %v1042 = vpop.f32.mrb[0].mxu0
        %v1043 = vadd.f32 %v930, %v1042
        %v1044 = vpop.f32.mrb[0].mxu0
        %1045 = vmatprep.mubr.bf16.mxu0 0
        %1046 = vmatmul.mubr.bf16.gmra.mrb[0].mxu0 %v597
        %v1047 = vpop.f32.mrb[0].mxu0
        %v1048 = vadd.f32 %v935, %v1047
        %v1049 = vpop.f32.mrb[0].mxu0
        %v1050 = vpop.f32.mrb[0].mxu0
        %v1051 = vadd.f32 %v938, %v1050
        %v1052 = vpop.f32.mrb[0].mxu0
        %1053 = vmatprep.mubr.bf16.mxu0 0
        %1054 = vmatmul.mubr.bf16.gmra.mrb[0].mxu0 %v599
        %v1055 = vpop.f32.mrb[0].mxu0
        %v1056 = vadd.f32 %v943, %v1055
        %v1057 = vpop.f32.mrb[0].mxu0
        %v1058 = vpop.f32.mrb[0].mxu0
        %v1059 = vadd.f32 %v946, %v1058
        %v1060 = vpop.f32.mrb[0].mxu0
        %1061 = vmatprep.mubr.bf16.mxu0 0
        %1062 = vmatmul.mubr.bf16.gmra.mrb[0].mxu0 %v601
        %v1063 = vpop.f32.mrb[0].mxu0
        %v1064 = vadd.f32 %v951, %v1063
        %v1065 = vpop.f32.mrb[0].mxu0
        %v1066 = vpop.f32.mrb[0].mxu0
        %v1067 = vadd.f32 %v954, %v1066
        %v1068 = vpop.f32.mrb[0].mxu0
        %1069 = vmatprep.mubr.bf16.mxu0 0
        %1070 = vmatmul.mubr.bf16.gmra.mrb[0].mxu0 %v603
        %v1071 = vpop.f32.mrb[0].mxu0
        %v1072 = vadd.f32 %v959, %v1071
        %v1073 = vpop.f32.mrb[0].mxu0
        %v1074 = vpop.f32.mrb[0].mxu0
        %v1075 = vadd.f32 %v962, %v1074
        %v1076 = vpop.f32.mrb[0].mxu0
        %1077 = vmatprep.mubr.bf16.mxu0 0
        %1078 = vmatmul.mubr.bf16.gmra.mrb[0].mxu0 %v605
        %v1079 = vpop.f32.mrb[0].mxu0
        %v1080 = vadd.f32 %v967, %v1079
        %v1081 = vpop.f32.mrb[0].mxu0
        %v1082 = vpop.f32.mrb[0].mxu0
        %v1083 = vadd.f32 %v970, %v1082
        %v1084 = vpop.f32.mrb[0].mxu0
        %1085 = vdwg.mxu0
        %v1134 = vunpack.c.l.b16 %v620
        %v1135 = vunpack.c.l.b16 %v621
        %v1136 = vunpack.c.l.b16 %v622
        %v1137 = vunpack.c.l.b16 %v623
        %v1138 = vunpack.c.l.b16 %v624
        %v1139 = vunpack.c.l.b16 %v625
        %v1140 = vunpack.c.l.b16 %v626
        %v1141 = vunpack.c.l.b16 %v627
        %v1142 = vunpack.c.l.b16 %v628
        %v1143 = vunpack.c.l.b16 %v629
        %v1144 = vunpack.c.l.b16 %v630
        %v1145 = vunpack.c.l.b16 %v631
        %v1146 = vunpack.c.l.b16 %v632
        %v1147 = vunpack.c.l.b16 %v633
        %v1148 = vunpack.c.l.b16 %v634
        %v1149 = vunpack.c.l.b16 %v635
        %v1150 = vunpack.c.l.b16 %v636
        %v1151 = vunpack.c.l.b16 %v637
        %v1152 = vunpack.c.l.b16 %v638
        %v1153 = vunpack.c.l.b16 %v639
        %v1154 = vunpack.c.l.b16 %v640
        %v1155 = vunpack.c.l.b16 %v641
        %v1156 = vunpack.c.l.b16 %v642
        %v1157 = vunpack.c.l.b16 %v643
        %v1158 = vunpack.c.l.b16 %v644
        %v1159 = vunpack.c.l.b16 %v645
        %v1160 = vunpack.c.l.b16 %v646
        %v1161 = vunpack.c.l.b16 %v647
        %v1162 = vunpack.c.l.b16 %v648
        %v1163 = vunpack.c.l.b16 %v649
        %v1164 = vunpack.c.l.b16 %v650
        %v1165 = vunpack.c.l.b16 %v651
        %v1166 = vunpack.c.l.b16 %v652
        %v1167 = vunpack.c.l.b16 %v653
        %v1168 = vunpack.c.l.b16 %v654
        %v1169 = vunpack.c.l.b16 %v655
        %v1170 = vunpack.c.l.b16 %v656
        %v1171 = vunpack.c.l.b16 %v657
        %v1172 = vunpack.c.l.b16 %v658
        %v1173 = vunpack.c.l.b16 %v659
        %v1174 = vunpack.c.l.b16 %v660
        %v1175 = vunpack.c.l.b16 %v661
        %v1176 = vunpack.c.l.b16 %v662
        %v1177 = vunpack.c.l.b16 %v663
        %v1178 = vunpack.c.l.b16 %v664
        %v1179 = vunpack.c.l.b16 %v665
        %v1180 = vunpack.c.l.b16 %v666
        %v1181 = vunpack.c.l.b16 %v667
        %v1182 = vpack.c.b16 %v1135, %v1134
        %v1183 = vpack.c.b16 %v1137, %v1136
        %v1184 = vpack.c.b16 %v1139, %v1138
        %v1185 = vpack.c.b16 %v1141, %v1140
        %v1186 = vpack.c.b16 %v1143, %v1142
        %v1187 = vpack.c.b16 %v1145, %v1144
        %v1188 = vpack.c.b16 %v1147, %v1146
        %v1189 = vpack.c.b16 %v1149, %v1148
        %v1190 = vpack.c.b16 %v1151, %v1150
        %v1191 = vpack.c.b16 %v1153, %v1152
        %v1192 = vpack.c.b16 %v1155, %v1154
        %v1193 = vpack.c.b16 %v1157, %v1156
        %v1194 = vpack.c.b16 %v1159, %v1158
        %v1195 = vpack.c.b16 %v1161, %v1160
        %v1196 = vpack.c.b16 %v1163, %v1162
        %v1197 = vpack.c.b16 %v1165, %v1164
        %v1198 = vpack.c.b16 %v1167, %v1166
        %v1199 = vpack.c.b16 %v1169, %v1168
        %v1200 = vpack.c.b16 %v1171, %v1170
        %v1201 = vpack.c.b16 %v1173, %v1172
        %v1202 = vpack.c.b16 %v1175, %v1174
        %v1203 = vpack.c.b16 %v1177, %v1176
        %v1204 = vpack.c.b16 %v1179, %v1178
        %v1205 = vpack.c.b16 %v1181, %v1180
        %1230 = vmatprep.subr.bf16.mxu0 0
        %1231 = vmatpush1.bf16.msra.mxu0 %v1182
        %1232 = vmatprep.subr.bf16.mxu0 0
        %1233 = vmatpush1.bf16.msra.mxu0 %v1183
        %1234 = vmatprep.subr.bf16.mxu0 0
        %1235 = vmatpush1.bf16.msra.mxu0 %v1184
        %1236 = vmatprep.subr.bf16.mxu0 0
        %1237 = vmatpush1.bf16.msra.mxu0 %v1185
        %1238 = vmatprep.subr.bf16.mxu0 0
        %1239 = vmatpush1.bf16.msra.mxu0 %v1186
        %1240 = vmatprep.subr.bf16.mxu0 0
        %1241 = vmatpush1.bf16.msra.mxu0 %v1187
        %1242 = vmatprep.subr.bf16.mxu0 0
        %1243 = vmatpush1.bf16.msra.mxu0 %v1188
        %1244 = vmatprep.subr.bf16.mxu0 0
        %1245 = vmatpush1.bf16.msra.mxu0 %v1189
        %1246 = vmatprep.subr.bf16.mxu0 0
        %1247 = vmatpush1.bf16.msra.mxu0 %v1190
        %1248 = vmatprep.subr.bf16.mxu0 0
        %1249 = vmatpush1.bf16.msra.mxu0 %v1191
        %1250 = vmatprep.subr.bf16.mxu0 0
        %1251 = vmatpush1.bf16.msra.mxu0 %v1192
        %1252 = vmatprep.subr.bf16.mxu0 0
        %1253 = vmatpush1.bf16.msra.mxu0 %v1193
        %1254 = vmatprep.subr.bf16.mxu0 0
        %1255 = vmatpush1.bf16.msra.mxu0 %v1194
        %1256 = vmatprep.subr.bf16.mxu0 0
        %1257 = vmatpush1.bf16.msra.mxu0 %v1195
        %1258 = vmatprep.subr.bf16.mxu0 0
        %1259 = vmatpush1.bf16.msra.mxu0 %v1196
        %1260 = vmatprep.subr.bf16.mxu0 0
        %1261 = vmatpush1.bf16.msra.mxu0 %v1197
        %1262 = vmatprep.mubr.bf16.mxu0 %v478
        %1263 = vmatmul.mubr.bf16.gmra.mrb[0].mxu0 %v379
        %v1264 = vpop.f32.mrb[0].mxu0
        %v1265 = vadd.f32 %v1008, %v1264
        %v1266 = vpop.f32.mrb[0].mxu0
        %v1267 = vpop.f32.mrb[0].mxu0
        %v1268 = vadd.f32 %v1011, %v1267
        %v1269 = vpop.f32.mrb[0].mxu0
        %1270 = vmatprep.mubr.bf16.mxu0 %v486
        %1271 = vmatmul.mubr.bf16.gmra.mrb[0].mxu0 %v380
        %v1272 = vpop.f32.mrb[0].mxu0
        %v1273 = vadd.f32 %v1016, %v1272
        %v1274 = vpop.f32.mrb[0].mxu0
        %v1275 = vpop.f32.mrb[0].mxu0
        %v1276 = vadd.f32 %v1019, %v1275
        %v1277 = vpop.f32.mrb[0].mxu0
        %1278 = vmatprep.mubr.bf16.mxu0 %v494
        %1279 = vmatmul.mubr.bf16.gmra.mrb[0].mxu0 %v381
        %v1280 = vpop.f32.mrb[0].mxu0
        %v1281 = vadd.f32 %v1024, %v1280
        %v1282 = vpop.f32.mrb[0].mxu0
        %v1283 = vpop.f32.mrb[0].mxu0
        %v1284 = vadd.f32 %v1027, %v1283
        %v1285 = vpop.f32.mrb[0].mxu0
        %1286 = vmatprep.mubr.bf16.mxu0 %v502
        %1287 = vmatmul.mubr.bf16.gmra.mrb[0].mxu0 %v382
        %v1288 = vpop.f32.mrb[0].mxu0
        %v1289 = vadd.f32 %v1032, %v1288
        %v1290 = vpop.f32.mrb[0].mxu0
        %v1291 = vpop.f32.mrb[0].mxu0
        %v1292 = vadd.f32 %v1035, %v1291
        %v1293 = vpop.f32.mrb[0].mxu0
        %1294 = vmatprep.mubr.bf16.mxu0 %v510
        %1295 = vmatmul.mubr.bf16.gmra.mrb[0].mxu0 %v383
        %v1296 = vpop.f32.mrb[0].mxu0
        %v1297 = vadd.f32 %v1040, %v1296
        %v1298 = vpop.f32.mrb[0].mxu0
        %v1299 = vpop.f32.mrb[0].mxu0
        %v1300 = vadd.f32 %v1043, %v1299
        %v1301 = vpop.f32.mrb[0].mxu0
        %1302 = vmatprep.mubr.bf16.mxu0 %v518
        %1303 = vmatmul.mubr.bf16.gmra.mrb[0].mxu0 %v384
        %v1304 = vpop.f32.mrb[0].mxu0
        %v1305 = vadd.f32 %v1048, %v1304
        %v1306 = vpop.f32.mrb[0].mxu0
        %v1307 = vpop.f32.mrb[0].mxu0
        %v1308 = vadd.f32 %v1051, %v1307
        %v1309 = vpop.f32.mrb[0].mxu0
        %1310 = vmatprep.mubr.bf16.mxu0 %v526
        %1311 = vmatmul.mubr.bf16.gmra.mrb[0].mxu0 %v385
        %v1312 = vpop.f32.mrb[0].mxu0
        %v1313 = vadd.f32 %v1056, %v1312
        %v1314 = vpop.f32.mrb[0].mxu0
        %v1315 = vpop.f32.mrb[0].mxu0
        %v1316 = vadd.f32 %v1059, %v1315
        %v1317 = vpop.f32.mrb[0].mxu0
        %1318 = vmatprep.mubr.bf16.mxu0 %v534
        %1319 = vmatmul.mubr.bf16.gmra.mrb[0].mxu0 %v386
        %v1320 = vpop.f32.mrb[0].mxu0
        %v1321 = vadd.f32 %v1064, %v1320
        %v1322 = vpop.f32.mrb[0].mxu0
        %v1323 = vpop.f32.mrb[0].mxu0
        %v1324 = vadd.f32 %v1067, %v1323
        %v1325 = vpop.f32.mrb[0].mxu0
        %1326 = vmatprep.mubr.bf16.mxu0 %v542
        %1327 = vmatmul.mubr.bf16.gmra.mrb[0].mxu0 %v387
        %v1328 = vpop.f32.mrb[0].mxu0
        %v1329 = vadd.f32 %v1072, %v1328
        %v1330 = vpop.f32.mrb[0].mxu0
        %v1331 = vpop.f32.mrb[0].mxu0
        %v1332 = vadd.f32 %v1075, %v1331
        %v1333 = vpop.f32.mrb[0].mxu0
        %1334 = vmatprep.mubr.bf16.mxu0 %v550
        %1335 = vmatmul.mubr.bf16.gmra.mrb[0].mxu0 %v388
        %v1336 = vpop.f32.mrb[0].mxu0
        %v1337 = vadd.f32 %v1080, %v1336
        %v1338 = vpop.f32.mrb[0].mxu0
        %v1339 = vpop.f32.mrb[0].mxu0
        %v1340 = vadd.f32 %v1083, %v1339
        %v1341 = vpop.f32.mrb[0].mxu0
        %1342 = vdwg.mxu0
        %1343 = vmatprep.subr.bf16.mxu0 0
        %1344 = vmatpush1.bf16.msra.mxu0 %v1198
        %1345 = vmatprep.subr.bf16.mxu0 0
        %1346 = vmatpush1.bf16.msra.mxu0 %v1199
        %1347 = vmatprep.subr.bf16.mxu0 0
        %1348 = vmatpush1.bf16.msra.mxu0 %v1200
        %1349 = vmatprep.subr.bf16.mxu0 0
        %1350 = vmatpush1.bf16.msra.mxu0 %v1201
        %1351 = vmatprep.subr.bf16.mxu0 0
        %1352 = vmatpush1.bf16.msra.mxu0 %v1202
        %1353 = vmatprep.subr.bf16.mxu0 0
        %1354 = vmatpush1.bf16.msra.mxu0 %v1203
        %1355 = vmatprep.subr.bf16.mxu0 0
        %1356 = vmatpush1.bf16.msra.mxu0 %v1204
        %1357 = vmatprep.subr.bf16.mxu0 0
        %1358 = vmatpush1.bf16.msra.mxu0 %v1205
        %1359 = vmatprep.subr.bf16.mxu0 0
        %1360 = vmatpush1.bf16.msra.mxu0 0
        %1361 = vmatprep.subr.bf16.mxu0 0
        %1362 = vmatpush1.bf16.msra.mxu0 0
        %1363 = vmatprep.subr.bf16.mxu0 0
        %1364 = vmatpush1.bf16.msra.mxu0 0
        %1365 = vmatprep.subr.bf16.mxu0 0
        %1366 = vmatpush1.bf16.msra.mxu0 0
        %1367 = vmatprep.subr.bf16.mxu0 0
        %1368 = vmatpush1.bf16.msra.mxu0 0
        %1369 = vmatprep.subr.bf16.mxu0 0
        %1370 = vmatpush1.bf16.msra.mxu0 0
        %1371 = vmatprep.subr.bf16.mxu0 0
        %1372 = vmatpush1.bf16.msra.mxu0 0
        %1373 = vmatprep.subr.bf16.mxu0 0
        %1374 = vmatpush1.bf16.msra.mxu0 0
        %1375 = vmatprep.mubr.bf16.mxu0 0
        %1376 = vmatmul.mubr.bf16.gmra.mrb[0].mxu0 %v585
        %v1377 = vpop.f32.mrb[0].mxu0
        %v1378 = vadd.f32 %v1265, %v1377
        %v1379 = vpop.f32.mrb[0].mxu0
        %v1380 = vpop.f32.mrb[0].mxu0
        %v1381 = vadd.f32 %v1268, %v1380
        %v1382 = vpop.f32.mrb[0].mxu0
        %1383 = vmatprep.mubr.bf16.mxu0 0
        %1384 = vmatmul.mubr.bf16.gmra.mrb[0].mxu0 %v587
        %v1385 = vpop.f32.mrb[0].mxu0
        %v1386 = vadd.f32 %v1273, %v1385
        %v1387 = vpop.f32.mrb[0].mxu0
        %v1388 = vpop.f32.mrb[0].mxu0
        %v1389 = vadd.f32 %v1276, %v1388
        %v1390 = vpop.f32.mrb[0].mxu0
        %1391 = vmatprep.mubr.bf16.mxu0 0
        %1392 = vmatmul.mubr.bf16.gmra.mrb[0].mxu0 %v589
        %v1393 = vpop.f32.mrb[0].mxu0
        %v1394 = vadd.f32 %v1281, %v1393
        %v1395 = vpop.f32.mrb[0].mxu0
        %v1396 = vpop.f32.mrb[0].mxu0
        %v1397 = vadd.f32 %v1284, %v1396
        %v1398 = vpop.f32.mrb[0].mxu0
        %1399 = vmatprep.mubr.bf16.mxu0 0
        %1400 = vmatmul.mubr.bf16.gmra.mrb[0].mxu0 %v591
        %v1401 = vpop.f32.mrb[0].mxu0
        %v1402 = vadd.f32 %v1289, %v1401
        %v1403 = vpop.f32.mrb[0].mxu0
        %v1404 = vpop.f32.mrb[0].mxu0
        %v1405 = vadd.f32 %v1292, %v1404
        %v1406 = vpop.f32.mrb[0].mxu0
        %1407 = vmatprep.mubr.bf16.mxu0 0
        %1408 = vmatmul.mubr.bf16.gmra.mrb[0].mxu0 %v593
        %v1409 = vpop.f32.mrb[0].mxu0
        %v1410 = vadd.f32 %v1297, %v1409
        %v1411 = vpop.f32.mrb[0].mxu0
        %v1412 = vpop.f32.mrb[0].mxu0
        %v1413 = vadd.f32 %v1300, %v1412
        %v1414 = vpop.f32.mrb[0].mxu0
        %1415 = vmatprep.mubr.bf16.mxu0 0
        %1416 = vmatmul.mubr.bf16.gmra.mrb[0].mxu0 %v595
        %v1417 = vpop.f32.mrb[0].mxu0
        %v1418 = vadd.f32 %v1305, %v1417
        %v1419 = vpop.f32.mrb[0].mxu0
        %v1420 = vpop.f32.mrb[0].mxu0
        %v1421 = vadd.f32 %v1308, %v1420
        %v1422 = vpop.f32.mrb[0].mxu0
        %1423 = vmatprep.mubr.bf16.mxu0 0
        %1424 = vmatmul.mubr.bf16.gmra.mrb[0].mxu0 %v597
        %v1425 = vpop.f32.mrb[0].mxu0
        %v1426 = vadd.f32 %v1313, %v1425
        %v1427 = vpop.f32.mrb[0].mxu0
        %v1428 = vpop.f32.mrb[0].mxu0
        %v1429 = vadd.f32 %v1316, %v1428
        %v1430 = vpop.f32.mrb[0].mxu0
        %1431 = vmatprep.mubr.bf16.mxu0 0
        %1432 = vmatmul.mubr.bf16.gmra.mrb[0].mxu0 %v599
        %v1433 = vpop.f32.mrb[0].mxu0
        %v1434 = vadd.f32 %v1321, %v1433
        %v1435 = vpop.f32.mrb[0].mxu0
        %v1436 = vpop.f32.mrb[0].mxu0
        %v1437 = vadd.f32 %v1324, %v1436
        %v1438 = vpop.f32.mrb[0].mxu0
        %1439 = vmatprep.mubr.bf16.mxu0 0
        %1440 = vmatmul.mubr.bf16.gmra.mrb[0].mxu0 %v601
        %v1441 = vpop.f32.mrb[0].mxu0
        %v1442 = vadd.f32 %v1329, %v1441
        %v1443 = vpop.f32.mrb[0].mxu0
        %v1444 = vpop.f32.mrb[0].mxu0
        %v1445 = vadd.f32 %v1332, %v1444
        %v1446 = vpop.f32.mrb[0].mxu0
        %1447 = vmatprep.mubr.bf16.mxu0 0
        %1448 = vmatmul.mubr.bf16.gmra.mrb[0].mxu0 %v603
        %v1449 = vpop.f32.mrb[0].mxu0
        %v1450 = vadd.f32 %v1337, %v1449
        %v1451 = vpop.f32.mrb[0].mxu0
        %v1452 = vpop.f32.mrb[0].mxu0
        %v1453 = vadd.f32 %v1340, %v1452
        %v1454 = vpop.f32.mrb[0].mxu0
        %1455 = vdwg.mxu0
        %v1456 = vld [vmem:[#allocation5 + $0x180] sm:$0xf]
        %v1457 = vld [vmem:[#allocation5 + $0x184] sm:$0xf]
        %v1458 = vld [vmem:[#allocation5 + $0x188] sm:$0xf]
        %v1459 = vld [vmem:[#allocation5 + $0x18c] sm:$0xf]
        %v1460 = vld [vmem:[#allocation5 + $0x190] sm:$0xf]
        %v1461 = vld [vmem:[#allocation5 + $0x194] sm:$0xf]
        %v1462 = vld [vmem:[#allocation5 + $0x198] sm:$0xf]
        %v1463 = vld [vmem:[#allocation5 + $0x19c] sm:$0xf]
        %v1464 = vld [vmem:[#allocation5 + $0x1a0] sm:$0xf]
        %v1465 = vld [vmem:[#allocation5 + $0x1a4] sm:$0xf]
        %v1466 = vld [vmem:[#allocation5 + $0x1a8] sm:$0xf]
        %v1467 = vld [vmem:[#allocation5 + $0x1ac] sm:$0xf]
        %v1468 = vld [vmem:[#allocation5 + $0x1b0] sm:$0xf]
        %v1469 = vld [vmem:[#allocation5 + $0x1b4] sm:$0xf]
        %v1470 = vld [vmem:[#allocation5 + $0x1b8] sm:$0xf]
        %v1471 = vld [vmem:[#allocation5 + $0x1bc] sm:$0xf]
        %v1472 = vld [vmem:[#allocation5 + $0x1c0] sm:$0xf]
        %v1473 = vld [vmem:[#allocation5 + $0x1c4] sm:$0xf]
        %v1474 = vld [vmem:[#allocation5 + $0x1c8] sm:$0xf]
        %v1475 = vld [vmem:[#allocation5 + $0x1cc] sm:$0xf]
        %v1476 = vld [vmem:[#allocation5 + $0x1d0] sm:$0xf]
        %v1477 = vld [vmem:[#allocation5 + $0x1d4] sm:$0xf]
        %v1478 = vld [vmem:[#allocation5 + $0x1d8] sm:$0xf]
        %v1479 = vld [vmem:[#allocation5 + $0x1dc] sm:$0xf]
        %v1480 = vld [vmem:[#allocation5 + $0x1e0] sm:$0xf]
        %v1481 = vld [vmem:[#allocation5 + $0x1e4] sm:$0xf]
        %v1482 = vld [vmem:[#allocation5 + $0x1e8] sm:$0xf]
        %v1483 = vld [vmem:[#allocation5 + $0x1ec] sm:$0xf]
        %v1484 = vld [vmem:[#allocation5 + $0x1f0] sm:$0xf]
        %v1485 = vld [vmem:[#allocation5 + $0x1f4] sm:$0xf]
        %v1486 = vld [vmem:[#allocation5 + $0x1f8] sm:$0xf]
        %v1487 = vld [vmem:[#allocation5 + $0x1fc] sm:$0xf]
        %v1488 = vld [vmem:[#allocation5 + $0x200] sm:$0xf]
        %v1489 = vld [vmem:[#allocation5 + $0x204] sm:$0xf]
        %v1490 = vld [vmem:[#allocation5 + $0x208] sm:$0xf]
        %v1491 = vld [vmem:[#allocation5 + $0x20c] sm:$0xf]
        %v1492 = vld [vmem:[#allocation5 + $0x210] sm:$0xf]
        %v1493 = vld [vmem:[#allocation5 + $0x214] sm:$0xf]
        %v1494 = vld [vmem:[#allocation5 + $0x218] sm:$0xf]
        %v1495 = vld [vmem:[#allocation5 + $0x21c] sm:$0xf]
        %v1496 = vld [vmem:[#allocation5 + $0x220] sm:$0xf]
        %v1497 = vld [vmem:[#allocation5 + $0x224] sm:$0xf]
        %v1498 = vld [vmem:[#allocation5 + $0x228] sm:$0xf]
        %v1499 = vld [vmem:[#allocation5 + $0x22c] sm:$0xf]
        %v1500 = vld [vmem:[#allocation5 + $0x230] sm:$0xf]
        %v1501 = vld [vmem:[#allocation5 + $0x234] sm:$0xf]
        %v1502 = vld [vmem:[#allocation5 + $0x238] sm:$0xf]
        %v1503 = vld [vmem:[#allocation5 + $0x23c] sm:$0xf]
        %v1552 = vunpack.c.l.b16 %v1456
        %v1553 = vunpack.c.l.b16 %v1457
        %v1554 = vunpack.c.l.b16 %v1458
        %v1555 = vunpack.c.l.b16 %v1459
        %v1556 = vunpack.c.l.b16 %v1460
        %v1557 = vunpack.c.l.b16 %v1461
        %v1558 = vunpack.c.l.b16 %v1462
        %v1559 = vunpack.c.l.b16 %v1463
        %v1560 = vunpack.c.l.b16 %v1464
        %v1561 = vunpack.c.l.b16 %v1465
        %v1562 = vunpack.c.l.b16 %v1466
        %v1563 = vunpack.c.l.b16 %v1467
        %v1564 = vunpack.c.l.b16 %v1468
        %v1565 = vunpack.c.l.b16 %v1469
        %v1566 = vunpack.c.l.b16 %v1470
        %v1567 = vunpack.c.l.b16 %v1471
        %v1568 = vunpack.c.l.b16 %v1472
        %v1569 = vunpack.c.l.b16 %v1473
        %v1570 = vunpack.c.l.b16 %v1474
        %v1571 = vunpack.c.l.b16 %v1475
        %v1572 = vunpack.c.l.b16 %v1476
        %v1573 = vunpack.c.l.b16 %v1477
        %v1574 = vunpack.c.l.b16 %v1478
        %v1575 = vunpack.c.l.b16 %v1479
        %v1576 = vunpack.c.l.b16 %v1480
        %v1577 = vunpack.c.l.b16 %v1481
        %v1578 = vunpack.c.l.b16 %v1482
        %v1579 = vunpack.c.l.b16 %v1483
        %v1580 = vunpack.c.l.b16 %v1484
        %v1581 = vunpack.c.l.b16 %v1485
        %v1582 = vunpack.c.l.b16 %v1486
        %v1583 = vunpack.c.l.b16 %v1487
        %v1584 = vunpack.c.l.b16 %v1488
        %v1585 = vunpack.c.l.b16 %v1489
        %v1586 = vunpack.c.l.b16 %v1490
        %v1587 = vunpack.c.l.b16 %v1491
        %v1588 = vunpack.c.l.b16 %v1492
        %v1589 = vunpack.c.l.b16 %v1493
        %v1590 = vunpack.c.l.b16 %v1494
        %v1591 = vunpack.c.l.b16 %v1495
        %v1592 = vunpack.c.l.b16 %v1496
        %v1593 = vunpack.c.l.b16 %v1497
        %v1594 = vunpack.c.l.b16 %v1498
        %v1595 = vunpack.c.l.b16 %v1499
        %v1596 = vunpack.c.l.b16 %v1500
        %v1597 = vunpack.c.l.b16 %v1501
        %v1598 = vunpack.c.l.b16 %v1502
        %v1599 = vunpack.c.l.b16 %v1503
        %v1600 = vpack.c.b16 %v1553, %v1552
        %v1601 = vpack.c.b16 %v1555, %v1554
        %v1602 = vpack.c.b16 %v1557, %v1556
        %v1603 = vpack.c.b16 %v1559, %v1558
        %v1604 = vpack.c.b16 %v1561, %v1560
        %v1605 = vpack.c.b16 %v1563, %v1562
        %v1606 = vpack.c.b16 %v1565, %v1564
        %v1607 = vpack.c.b16 %v1567, %v1566
        %v1608 = vpack.c.b16 %v1569, %v1568
        %v1609 = vpack.c.b16 %v1571, %v1570
        %v1610 = vpack.c.b16 %v1573, %v1572
        %v1611 = vpack.c.b16 %v1575, %v1574
        %v1612 = vpack.c.b16 %v1577, %v1576
        %v1613 = vpack.c.b16 %v1579, %v1578
        %v1614 = vpack.c.b16 %v1581, %v1580
        %v1615 = vpack.c.b16 %v1583, %v1582
        %v1616 = vpack.c.b16 %v1585, %v1584
        %v1617 = vpack.c.b16 %v1587, %v1586
        %v1618 = vpack.c.b16 %v1589, %v1588
        %v1619 = vpack.c.b16 %v1591, %v1590
        %v1620 = vpack.c.b16 %v1593, %v1592
        %v1621 = vpack.c.b16 %v1595, %v1594
        %v1622 = vpack.c.b16 %v1597, %v1596
        %v1623 = vpack.c.b16 %v1599, %v1598
        %1648 = vmatprep.subr.bf16.mxu0 0
        %1649 = vmatpush1.bf16.msra.mxu0 %v1600
        %1650 = vmatprep.subr.bf16.mxu0 0
        %1651 = vmatpush1.bf16.msra.mxu0 %v1601
        %1652 = vmatprep.subr.bf16.mxu0 0
        %1653 = vmatpush1.bf16.msra.mxu0 %v1602
        %1654 = vmatprep.subr.bf16.mxu0 0
        %1655 = vmatpush1.bf16.msra.mxu0 %v1603
        %1656 = vmatprep.subr.bf16.mxu0 0
        %1657 = vmatpush1.bf16.msra.mxu0 %v1604
        %1658 = vmatprep.subr.bf16.mxu0 0
        %1659 = vmatpush1.bf16.msra.mxu0 %v1605
        %1660 = vmatprep.subr.bf16.mxu0 0
        %1661 = vmatpush1.bf16.msra.mxu0 %v1606
        %1662 = vmatprep.subr.bf16.mxu0 0
        %1663 = vmatpush1.bf16.msra.mxu0 %v1607
        %1664 = vmatprep.subr.bf16.mxu0 0
        %1665 = vmatpush1.bf16.msra.mxu0 %v1608
        %1666 = vmatprep.subr.bf16.mxu0 0
        %1667 = vmatpush1.bf16.msra.mxu0 %v1609
        %1668 = vmatprep.subr.bf16.mxu0 0
        %1669 = vmatpush1.bf16.msra.mxu0 %v1610
        %1670 = vmatprep.subr.bf16.mxu0 0
        %1671 = vmatpush1.bf16.msra.mxu0 %v1611
        %1672 = vmatprep.subr.bf16.mxu0 0
        %1673 = vmatpush1.bf16.msra.mxu0 %v1612
        %1674 = vmatprep.subr.bf16.mxu0 0
        %1675 = vmatpush1.bf16.msra.mxu0 %v1613
        %1676 = vmatprep.subr.bf16.mxu0 0
        %1677 = vmatpush1.bf16.msra.mxu0 %v1614
        %1678 = vmatprep.subr.bf16.mxu0 0
        %1679 = vmatpush1.bf16.msra.mxu0 %v1615
        %1680 = vmatprep.mubr.bf16.mxu0 %v494
        %1681 = vmatmul.mubr.bf16.gmra.mrb[0].mxu0 %v381
        %v1682 = vpop.f32.mrb[0].mxu0
        %v1683 = vadd.f32 0.0, %v1682
        %v1684 = vpop.f32.mrb[0].mxu0
        %v1685 = vpop.f32.mrb[0].mxu0
        %v1686 = vadd.f32 0.0, %v1685
        %v1687 = vpop.f32.mrb[0].mxu0
        %1688 = vmatprep.mubr.bf16.mxu0 %v502
        %1689 = vmatmul.mubr.bf16.gmra.mrb[0].mxu0 %v382
        %v1690 = vpop.f32.mrb[0].mxu0
        %v1691 = vadd.f32 0.0, %v1690
        %v1692 = vpop.f32.mrb[0].mxu0
        %v1693 = vpop.f32.mrb[0].mxu0
        %v1694 = vadd.f32 0.0, %v1693
        %v1695 = vpop.f32.mrb[0].mxu0
        %1696 = vmatprep.mubr.bf16.mxu0 %v510
        %1697 = vmatmul.mubr.bf16.gmra.mrb[0].mxu0 %v383
        %v1698 = vpop.f32.mrb[0].mxu0
        %v1699 = vadd.f32 0.0, %v1698
        %v1700 = vpop.f32.mrb[0].mxu0
        %v1701 = vpop.f32.mrb[0].mxu0
        %v1702 = vadd.f32 0.0, %v1701
        %v1703 = vpop.f32.mrb[0].mxu0
        %1704 = vmatprep.mubr.bf16.mxu0 %v518
        %1705 = vmatmul.mubr.bf16.gmra.mrb[0].mxu0 %v384
        %v1706 = vpop.f32.mrb[0].mxu0
        %v1707 = vadd.f32 0.0, %v1706
        %v1708 = vpop.f32.mrb[0].mxu0
        %v1709 = vpop.f32.mrb[0].mxu0
        %v1710 = vadd.f32 0.0, %v1709
        %v1711 = vpop.f32.mrb[0].mxu0
        %1712 = vmatprep.mubr.bf16.mxu0 %v526
        %1713 = vmatmul.mubr.bf16.gmra.mrb[0].mxu0 %v385
        %v1714 = vpop.f32.mrb[0].mxu0
        %v1715 = vadd.f32 0.0, %v1714
        %v1716 = vpop.f32.mrb[0].mxu0
        %v1717 = vpop.f32.mrb[0].mxu0
        %v1718 = vadd.f32 0.0, %v1717
        %v1719 = vpop.f32.mrb[0].mxu0
        %1720 = vmatprep.mubr.bf16.mxu0 %v534
        %1721 = vmatmul.mubr.bf16.gmra.mrb[0].mxu0 %v386
        %v1722 = vpop.f32.mrb[0].mxu0
        %v1723 = vadd.f32 0.0, %v1722
        %v1724 = vpop.f32.mrb[0].mxu0
        %v1725 = vpop.f32.mrb[0].mxu0
        %v1726 = vadd.f32 0.0, %v1725
        %v1727 = vpop.f32.mrb[0].mxu0
        %1728 = vmatprep.mubr.bf16.mxu0 %v542
        %1729 = vmatmul.mubr.bf16.gmra.mrb[0].mxu0 %v387
        %v1730 = vpop.f32.mrb[0].mxu0
        %v1731 = vadd.f32 0.0, %v1730
        %v1732 = vpop.f32.mrb[0].mxu0
        %v1733 = vpop.f32.mrb[0].mxu0
        %v1734 = vadd.f32 0.0, %v1733
        %v1735 = vpop.f32.mrb[0].mxu0
        %1736 = vmatprep.mubr.bf16.mxu0 %v550
        %1737 = vmatmul.mubr.bf16.gmra.mrb[0].mxu0 %v388
        %v1738 = vpop.f32.mrb[0].mxu0
        %v1739 = vadd.f32 0.0, %v1738
        %v1740 = vpop.f32.mrb[0].mxu0
        %v1741 = vpop.f32.mrb[0].mxu0
        %v1742 = vadd.f32 0.0, %v1741
        %v1743 = vpop.f32.mrb[0].mxu0
        %1744 = vmatprep.mubr.bf16.mxu0 %v558
        %1745 = vmatmul.mubr.bf16.gmra.mrb[0].mxu0 %v389
        %v1746 = vpop.f32.mrb[0].mxu0
        %v1747 = vadd.f32 0.0, %v1746
        %v1748 = vpop.f32.mrb[0].mxu0
        %v1749 = vpop.f32.mrb[0].mxu0
        %v1750 = vadd.f32 0.0, %v1749
        %v1751 = vpop.f32.mrb[0].mxu0
        %1752 = vmatprep.mubr.bf16.mxu0 %v566
        %1753 = vmatmul.mubr.bf16.gmra.mrb[0].mxu0 %v390
        %v1754 = vpop.f32.mrb[0].mxu0
        %v1755 = vadd.f32 0.0, %v1754
        %v1756 = vpop.f32.mrb[0].mxu0
        %v1757 = vpop.f32.mrb[0].mxu0
        %v1758 = vadd.f32 0.0, %v1757
        %v1759 = vpop.f32.mrb[0].mxu0
        %1760 = vdwg.mxu0
        %1761 = vmatprep.subr.bf16.mxu0 0
        %1762 = vmatpush1.bf16.msra.mxu0 %v1616
        %1763 = vmatprep.subr.bf16.mxu0 0
        %1764 = vmatpush1.bf16.msra.mxu0 %v1617
        %1765 = vmatprep.subr.bf16.mxu0 0
        %1766 = vmatpush1.bf16.msra.mxu0 %v1618
        %1767 = vmatprep.subr.bf16.mxu0 0
        %1768 = vmatpush1.bf16.msra.mxu0 %v1619
        %1769 = vmatprep.subr.bf16.mxu0 0
        %1770 = vmatpush1.bf16.msra.mxu0 %v1620
        %1771 = vmatprep.subr.bf16.mxu0 0
        %1772 = vmatpush1.bf16.msra.mxu0 %v1621
        %1773 = vmatprep.subr.bf16.mxu0 0
        %1774 = vmatpush1.bf16.msra.mxu0 %v1622
        %1775 = vmatprep.subr.bf16.mxu0 0
        %1776 = vmatpush1.bf16.msra.mxu0 %v1623
        %1777 = vmatprep.subr.bf16.mxu0 0
        %1778 = vmatpush1.bf16.msra.mxu0 0
        %1779 = vmatprep.subr.bf16.mxu0 0
        %1780 = vmatpush1.bf16.msra.mxu0 0
        %1781 = vmatprep.subr.bf16.mxu0 0
        %1782 = vmatpush1.bf16.msra.mxu0 0
        %1783 = vmatprep.subr.bf16.mxu0 0
        %1784 = vmatpush1.bf16.msra.mxu0 0
        %1785 = vmatprep.subr.bf16.mxu0 0
        %1786 = vmatpush1.bf16.msra.mxu0 0
        %1787 = vmatprep.subr.bf16.mxu0 0
        %1788 = vmatpush1.bf16.msra.mxu0 0
        %1789 = vmatprep.subr.bf16.mxu0 0
        %1790 = vmatpush1.bf16.msra.mxu0 0
        %1791 = vmatprep.subr.bf16.mxu0 0
        %1792 = vmatpush1.bf16.msra.mxu0 0
        %1793 = vmatprep.mubr.bf16.mxu0 0
        %1794 = vmatmul.mubr.bf16.gmra.mrb[0].mxu0 %v589
        %v1795 = vpop.f32.mrb[0].mxu0
        %v1796 = vadd.f32 %v1683, %v1795
        %v1797 = vpop.f32.mrb[0].mxu0
        %v1798 = vpop.f32.mrb[0].mxu0
        %v1799 = vadd.f32 %v1686, %v1798
        %v1800 = vpop.f32.mrb[0].mxu0
        %1801 = vmatprep.mubr.bf16.mxu0 0
        %1802 = vmatmul.mubr.bf16.gmra.mrb[0].mxu0 %v591
        %v1803 = vpop.f32.mrb[0].mxu0
        %v1804 = vadd.f32 %v1691, %v1803
        %v1805 = vpop.f32.mrb[0].mxu0
        %v1806 = vpop.f32.mrb[0].mxu0
        %v1807 = vadd.f32 %v1694, %v1806
        %v1808 = vpop.f32.mrb[0].mxu0
        %1809 = vmatprep.mubr.bf16.mxu0 0
        %1810 = vmatmul.mubr.bf16.gmra.mrb[0].mxu0 %v593
        %v1811 = vpop.f32.mrb[0].mxu0
        %v1812 = vadd.f32 %v1699, %v1811
        %v1813 = vpop.f32.mrb[0].mxu0
        %v1814 = vpop.f32.mrb[0].mxu0
        %v1815 = vadd.f32 %v1702, %v1814
        %v1816 = vpop.f32.mrb[0].mxu0
        %1817 = vmatprep.mubr.bf16.mxu0 0
        %1818 = vmatmul.mubr.bf16.gmra.mrb[0].mxu0 %v595
        %v1819 = vpop.f32.mrb[0].mxu0
        %v1820 = vadd.f32 %v1707, %v1819
        %v1821 = vpop.f32.mrb[0].mxu0
        %v1822 = vpop.f32.mrb[0].mxu0
        %v1823 = vadd.f32 %v1710, %v1822
        %v1824 = vpop.f32.mrb[0].mxu0
        %1825 = vmatprep.mubr.bf16.mxu0 0
        %1826 = vmatmul.mubr.bf16.gmra.mrb[0].mxu0 %v597
        %v1827 = vpop.f32.mrb[0].mxu0
        %v1828 = vadd.f32 %v1715, %v1827
        %v1829 = vpop.f32.mrb[0].mxu0
        %v1830 = vpop.f32.mrb[0].mxu0
        %v1831 = vadd.f32 %v1718, %v1830
        %v1832 = vpop.f32.mrb[0].mxu0
        %1833 = vmatprep.mubr.bf16.mxu0 0
        %1834 = vmatmul.mubr.bf16.gmra.mrb[0].mxu0 %v599
        %v1835 = vpop.f32.mrb[0].mxu0
        %v1836 = vadd.f32 %v1723, %v1835
        %v1837 = vpop.f32.mrb[0].mxu0
        %v1838 = vpop.f32.mrb[0].mxu0
        %v1839 = vadd.f32 %v1726, %v1838
        %v1840 = vpop.f32.mrb[0].mxu0
        %1841 = vmatprep.mubr.bf16.mxu0 0
        %1842 = vmatmul.mubr.bf16.gmra.mrb[0].mxu0 %v601
        %v1843 = vpop.f32.mrb[0].mxu0
        %v1844 = vadd.f32 %v1731, %v1843
        %v1845 = vpop.f32.mrb[0].mxu0
        %v1846 = vpop.f32.mrb[0].mxu0
        %v1847 = vadd.f32 %v1734, %v1846
        %v1848 = vpop.f32.mrb[0].mxu0
        %1849 = vmatprep.mubr.bf16.mxu0 0
        %1850 = vmatmul.mubr.bf16.gmra.mrb[0].mxu0 %v603
        %v1851 = vpop.f32.mrb[0].mxu0
        %v1852 = vadd.f32 %v1739, %v1851
        %v1853 = vpop.f32.mrb[0].mxu0
        %v1854 = vpop.f32.mrb[0].mxu0
        %v1855 = vadd.f32 %v1742, %v1854
        %v1856 = vpop.f32.mrb[0].mxu0
        %1857 = vmatprep.mubr.bf16.mxu0 0
        %1858 = vmatmul.mubr.bf16.gmra.mrb[0].mxu0 %v605
        %v1859 = vpop.f32.mrb[0].mxu0
        %v1860 = vadd.f32 %v1747, %v1859
        %v1861 = vpop.f32.mrb[0].mxu0
        %v1862 = vpop.f32.mrb[0].mxu0
        %v1863 = vadd.f32 %v1750, %v1862
        %v1864 = vpop.f32.mrb[0].mxu0
        %1865 = vmatprep.mubr.bf16.mxu0 0
        %1866 = vmatmul.mubr.bf16.gmra.mrb[0].mxu0 %v607
        %v1867 = vpop.f32.mrb[0].mxu0
        %v1868 = vadd.f32 %v1755, %v1867
        %v1869 = vpop.f32.mrb[0].mxu0
        %v1870 = vpop.f32.mrb[0].mxu0
        %v1871 = vadd.f32 %v1758, %v1870
        %v1872 = vpop.f32.mrb[0].mxu0
        %1873 = vdwg.mxu0
        %v1874 = vadd.f32 %v1378, %v1796
        %v1875 = vadd.f32 %v1381, %v1799
        %v1876 = vadd.f32 %v1386, %v1804
        %v1877 = vadd.f32 %v1389, %v1807
        %v1878 = vadd.f32 %v1394, %v1812
        %v1879 = vadd.f32 %v1397, %v1815
        %v1880 = vadd.f32 %v1402, %v1820
        %v1881 = vadd.f32 %v1405, %v1823
        %v1882 = vadd.f32 %v1410, %v1828
        %v1883 = vadd.f32 %v1413, %v1831
        %v1884 = vadd.f32 %v1418, %v1836
        %v1885 = vadd.f32 %v1421, %v1839
        %v1886 = vadd.f32 %v1426, %v1844
        %v1887 = vadd.f32 %v1429, %v1847
        %v1888 = vadd.f32 %v1434, %v1852
        %v1889 = vadd.f32 %v1437, %v1855
        %v1890 = vadd.f32 %v1442, %v1860
        %v1891 = vadd.f32 %v1445, %v1863
        %v1892 = vadd.f32 %v1450, %v1868
        %v1893 = vadd.f32 %v1453, %v1871
        %v1894 = vld [vmem:[%s276] sm:$0x1]
        %v1896 = vlaneseq
        %v1897 = vshrl.u32 %v1896, 7
        %v1898 = vsub.s32 0, %v1897
        %v1899 = vrot.slane %v1894, %v1898
        %v1901 = vmul.f32 %v1874, %v1899
        %v1902 = vmul.f32 %v1875, %v1899
        %v1903 = vmul.f32 %v1876, %v1899
        %v1904 = vmul.f32 %v1877, %v1899
        %v1905 = vmul.f32 %v1878, %v1899
        %v1906 = vmul.f32 %v1879, %v1899
        %v1907 = vmul.f32 %v1880, %v1899
        %v1908 = vmul.f32 %v1881, %v1899
        %v1909 = vmul.f32 %v1882, %v1899
        %v1910 = vmul.f32 %v1883, %v1899
        %v1911 = vmul.f32 %v1884, %v1899
        %v1912 = vmul.f32 %v1885, %v1899
        %v1913 = vmul.f32 %v1886, %v1899
        %v1914 = vmul.f32 %v1887, %v1899
        %v1915 = vmul.f32 %v1888, %v1899
        %v1916 = vmul.f32 %v1889, %v1899
        %v1917 = vmul.f32 %v1890, %v1899
        %v1918 = vmul.f32 %v1891, %v1899
        %v1919 = vmul.f32 %v1892, %v1899
        %v1920 = vmul.f32 %v1893, %v1899
        %v1921 = vld [vmem:[%s279] sm:$0x1]
        %v1923 = vlaneseq
        %v1924 = vshrl.u32 %v1923, 7
        %v1925 = vsub.s32 0, %v1924
        %v1926 = vrot.slane %v1921, %v1925
        %v1928 = vadd.f32 %v1901, %v1926
        %v1929 = vadd.f32 %v1902, %v1926
        %v1930 = vadd.f32 %v1903, %v1926
        %v1931 = vadd.f32 %v1904, %v1926
        %v1932 = vadd.f32 %v1905, %v1926
        %v1933 = vadd.f32 %v1906, %v1926
        %v1934 = vadd.f32 %v1907, %v1926
        %v1935 = vadd.f32 %v1908, %v1926
        %v1936 = vadd.f32 %v1909, %v1926
        %v1937 = vadd.f32 %v1910, %v1926
        %v1938 = vadd.f32 %v1911, %v1926
        %v1939 = vadd.f32 %v1912, %v1926
        %v1940 = vadd.f32 %v1913, %v1926
        %v1941 = vadd.f32 %v1914, %v1926
        %v1942 = vadd.f32 %v1915, %v1926
        %v1943 = vadd.f32 %v1916, %v1926
        %v1944 = vadd.f32 %v1917, %v1926
        %v1945 = vadd.f32 %v1918, %v1926
        %v1946 = vadd.f32 %v1919, %v1926
        %v1947 = vadd.f32 %v1920, %v1926
        %vm1948 = vcmp.ge.f32.partialorder %v1928, 0.0
        %vm1949 = vcmp.ge.f32.partialorder %v1929, 0.0
        %vm1950 = vcmp.ge.f32.partialorder %v1930, 0.0
        %vm1951 = vcmp.ge.f32.partialorder %v1931, 0.0
        %vm1952 = vcmp.ge.f32.partialorder %v1932, 0.0
        %vm1953 = vcmp.ge.f32.partialorder %v1933, 0.0
        %vm1954 = vcmp.ge.f32.partialorder %v1934, 0.0
        %vm1955 = vcmp.ge.f32.partialorder %v1935, 0.0
        %vm1956 = vcmp.ge.f32.partialorder %v1936, 0.0
        %vm1957 = vcmp.ge.f32.partialorder %v1937, 0.0
        %vm1958 = vcmp.ge.f32.partialorder %v1938, 0.0
        %vm1959 = vcmp.ge.f32.partialorder %v1939, 0.0
        %vm1960 = vcmp.ge.f32.partialorder %v1940, 0.0
        %vm1961 = vcmp.ge.f32.partialorder %v1941, 0.0
        %vm1962 = vcmp.ge.f32.partialorder %v1942, 0.0
        %vm1963 = vcmp.ge.f32.partialorder %v1943, 0.0
        %vm1964 = vcmp.ge.f32.partialorder %v1944, 0.0
        %vm1965 = vcmp.ge.f32.partialorder %v1945, 0.0
        %vm1966 = vcmp.ge.f32.partialorder %v1946, 0.0
        %vm1967 = vcmp.ge.f32.partialorder %v1947, 0.0
        %v1968 = vmul.f32 %v1928, 0.01
        %v1969 = vmul.f32 %v1929, 0.01
        %v1970 = vmul.f32 %v1930, 0.01
        %v1971 = vmul.f32 %v1931, 0.01
        %v1972 = vmul.f32 %v1932, 0.01
        %v1973 = vmul.f32 %v1933, 0.01
        %v1974 = vmul.f32 %v1934, 0.01
        %v1975 = vmul.f32 %v1935, 0.01
        %v1976 = vmul.f32 %v1936, 0.01
        %v1977 = vmul.f32 %v1937, 0.01
        %v1978 = vmul.f32 %v1938, 0.01
        %v1979 = vmul.f32 %v1939, 0.01
        %v1980 = vmul.f32 %v1940, 0.01
        %v1981 = vmul.f32 %v1941, 0.01
        %v1982 = vmul.f32 %v1942, 0.01
        %v1983 = vmul.f32 %v1943, 0.01
        %v1984 = vmul.f32 %v1944, 0.01
        %v1985 = vmul.f32 %v1945, 0.01
        %v1986 = vmul.f32 %v1946, 0.01
        %v1987 = vmul.f32 %v1947, 0.01
        %v1988 = vsel %vm1948, %v1928, %v1968
        %v1989 = vsel %vm1949, %v1929, %v1969
        %v1990 = vsel %vm1950, %v1930, %v1970
        %v1991 = vsel %vm1951, %v1931, %v1971
        %v1992 = vsel %vm1952, %v1932, %v1972
        %v1993 = vsel %vm1953, %v1933, %v1973
        %v1994 = vsel %vm1954, %v1934, %v1974
        %v1995 = vsel %vm1955, %v1935, %v1975
        %v1996 = vsel %vm1956, %v1936, %v1976
        %v1997 = vsel %vm1957, %v1937, %v1977
        %v1998 = vsel %vm1958, %v1938, %v1978
        %v1999 = vsel %vm1959, %v1939, %v1979
        %v2000 = vsel %vm1960, %v1940, %v1980
        %v2001 = vsel %vm1961, %v1941, %v1981
        %v2002 = vsel %vm1962, %v1942, %v1982
        %v2003 = vsel %vm1963, %v1943, %v1983
        %v2004 = vsel %vm1964, %v1944, %v1984
        %v2005 = vsel %vm1965, %v1945, %v1985
        %v2006 = vsel %vm1966, %v1946, %v1986
        %v2007 = vsel %vm1967, %v1947, %v1987
        %v2008 = vlaneseq
        %v2009 = vshrl.u32 %v2008, 7
        %v2010 = vadd.s32 %v2009, 8
        %v2011 = vadd.s32 %v2009, 16
        %v2012 = vadd.s32 %v2009, 24
        %v2013 = vadd.s32 %v2009, 32
        %v2014 = vadd.s32 %v2009, 40
        %v2015 = vadd.s32 %v2009, 48
        %v2016 = vadd.s32 %v2009, 56
        %v2017 = vadd.s32 %v2009, 64
        %v2018 = vadd.s32 %v2009, 72
        %v2019 = vadd.s32 %v2009, 80
        %v2020 = vadd.s32 %v2009, 88
        %v2021 = vadd.s32 %v2009, 96
        %v2022 = vadd.s32 %v2009, 104
        %v2023 = vadd.s32 %v2009, 112
        %v2024 = vadd.s32 %v2009, 120
        %v2025 = vadd.s32 %v2009, 128
        %v2026 = vadd.s32 %v2009, 136
        %v2027 = vadd.s32 %v2009, 144
        %v2028 = vadd.s32 %v2009, 152
        %vm2029 = vcmp.ge.s32.totalorder %v2009, 16
        %vm2030 = vcmp.ge.s32.totalorder %v2010, 16
        %vm2031 = vcmp.ge.s32.totalorder %v2011, 16
        %vm2032 = vcmp.ge.s32.totalorder %v2012, 16
        %vm2033 = vcmp.ge.s32.totalorder %v2013, 16
        %vm2034 = vcmp.ge.s32.totalorder %v2014, 16
        %vm2035 = vcmp.ge.s32.totalorder %v2015, 16
        %vm2036 = vcmp.ge.s32.totalorder %v2016, 16
        %vm2037 = vcmp.ge.s32.totalorder %v2017, 16
        %vm2038 = vcmp.ge.s32.totalorder %v2018, 16
        %vm2039 = vcmp.ge.s32.totalorder %v2019, 16
        %vm2040 = vcmp.ge.s32.totalorder %v2020, 16
        %vm2041 = vcmp.ge.s32.totalorder %v2021, 16
        %vm2042 = vcmp.ge.s32.totalorder %v2022, 16
        %vm2043 = vcmp.ge.s32.totalorder %v2023, 16
        %vm2044 = vcmp.ge.s32.totalorder %v2024, 16
        %vm2045 = vcmp.ge.s32.totalorder %v2025, 16
        %vm2046 = vcmp.ge.s32.totalorder %v2026, 16
        %vm2047 = vcmp.ge.s32.totalorder %v2027, 16
        %vm2048 = vcmp.ge.s32.totalorder %v2028, 16
        %vm2049 = vcmp.lt.s32.totalorder %v2009, 144
        %vm2050 = vcmp.lt.s32.totalorder %v2010, 144
        %vm2051 = vcmp.lt.s32.totalorder %v2011, 144
        %vm2052 = vcmp.lt.s32.totalorder %v2012, 144
        %vm2053 = vcmp.lt.s32.totalorder %v2013, 144
        %vm2054 = vcmp.lt.s32.totalorder %v2014, 144
        %vm2055 = vcmp.lt.s32.totalorder %v2015, 144
        %vm2056 = vcmp.lt.s32.totalorder %v2016, 144
        %vm2057 = vcmp.lt.s32.totalorder %v2017, 144
        %vm2058 = vcmp.lt.s32.totalorder %v2018, 144
        %vm2059 = vcmp.lt.s32.totalorder %v2019, 144
        %vm2060 = vcmp.lt.s32.totalorder %v2020, 144
        %vm2061 = vcmp.lt.s32.totalorder %v2021, 144
        %vm2062 = vcmp.lt.s32.totalorder %v2022, 144
        %vm2063 = vcmp.lt.s32.totalorder %v2023, 144
        %vm2064 = vcmp.lt.s32.totalorder %v2024, 144
        %vm2065 = vcmp.lt.s32.totalorder %v2025, 144
        %vm2066 = vcmp.lt.s32.totalorder %v2026, 144
        %vm2067 = vcmp.lt.s32.totalorder %v2027, 144
        %vm2068 = vcmp.lt.s32.totalorder %v2028, 144
        %vm2069 = vmand %vm2029, %vm2049
        %vm2070 = vmand %vm2030, %vm2050
        %vm2071 = vmand %vm2031, %vm2051
        %vm2072 = vmand %vm2032, %vm2052
        %vm2073 = vmand %vm2033, %vm2053
        %vm2074 = vmand %vm2034, %vm2054
        %vm2075 = vmand %vm2035, %vm2055
        %vm2076 = vmand %vm2036, %vm2056
        %vm2077 = vmand %vm2037, %vm2057
        %vm2078 = vmand %vm2038, %vm2058
        %vm2079 = vmand %vm2039, %vm2059
        %vm2080 = vmand %vm2040, %vm2060
        %vm2081 = vmand %vm2041, %vm2061
        %vm2082 = vmand %vm2042, %vm2062
        %vm2083 = vmand %vm2043, %vm2063
        %vm2084 = vmand %vm2044, %vm2064
        %vm2085 = vmand %vm2045, %vm2065
        %vm2086 = vmand %vm2046, %vm2066
        %vm2087 = vmand %vm2047, %vm2067
        %vm2088 = vmand %vm2048, %vm2068
        %v2089 = vand.u32 %v2009, 15
        %v2090 = vand.u32 %v2010, 15
        %v2091 = vand.u32 %v2011, 15
        %v2092 = vand.u32 %v2012, 15
        %v2093 = vand.u32 %v2013, 15
        %v2094 = vand.u32 %v2014, 15
        %v2095 = vand.u32 %v2015, 15
        %v2096 = vand.u32 %v2016, 15
        %v2097 = vand.u32 %v2017, 15
        %v2098 = vand.u32 %v2018, 15
        %v2099 = vand.u32 %v2019, 15
        %v2100 = vand.u32 %v2020, 15
        %v2101 = vand.u32 %v2021, 15
        %v2102 = vand.u32 %v2022, 15
        %v2103 = vand.u32 %v2023, 15
        %v2104 = vand.u32 %v2024, 15
        %v2105 = vand.u32 %v2025, 15
        %v2106 = vand.u32 %v2026, 15
        %v2107 = vand.u32 %v2027, 15
        %v2108 = vand.u32 %v2028, 15
        %vm2109 = vcmp.ge.s32.totalorder %v2089, 1
        %vm2110 = vcmp.ge.s32.totalorder %v2090, 1
        %vm2111 = vcmp.ge.s32.totalorder %v2091, 1
        %vm2112 = vcmp.ge.s32.totalorder %v2092, 1
        %vm2113 = vcmp.ge.s32.totalorder %v2093, 1
        %vm2114 = vcmp.ge.s32.totalorder %v2094, 1
        %vm2115 = vcmp.ge.s32.totalorder %v2095, 1
        %vm2116 = vcmp.ge.s32.totalorder %v2096, 1
        %vm2117 = vcmp.ge.s32.totalorder %v2097, 1
        %vm2118 = vcmp.ge.s32.totalorder %v2098, 1
        %vm2119 = vcmp.ge.s32.totalorder %v2099, 1
        %vm2120 = vcmp.ge.s32.totalorder %v2100, 1
        %vm2121 = vcmp.ge.s32.totalorder %v2101, 1
        %vm2122 = vcmp.ge.s32.totalorder %v2102, 1
        %vm2123 = vcmp.ge.s32.totalorder %v2103, 1
        %vm2124 = vcmp.ge.s32.totalorder %v2104, 1
        %vm2125 = vcmp.ge.s32.totalorder %v2105, 1
        %vm2126 = vcmp.ge.s32.totalorder %v2106, 1
        %vm2127 = vcmp.ge.s32.totalorder %v2107, 1
        %vm2128 = vcmp.ge.s32.totalorder %v2108, 1
        %vm2129 = vcmp.le.s32.totalorder %v2089, 8
        %vm2130 = vcmp.le.s32.totalorder %v2090, 8
        %vm2131 = vcmp.le.s32.totalorder %v2091, 8
        %vm2132 = vcmp.le.s32.totalorder %v2092, 8
        %vm2133 = vcmp.le.s32.totalorder %v2093, 8
        %vm2134 = vcmp.le.s32.totalorder %v2094, 8
        %vm2135 = vcmp.le.s32.totalorder %v2095, 8
        %vm2136 = vcmp.le.s32.totalorder %v2096, 8
        %vm2137 = vcmp.le.s32.totalorder %v2097, 8
        %vm2138 = vcmp.le.s32.totalorder %v2098, 8
        %vm2139 = vcmp.le.s32.totalorder %v2099, 8
        %vm2140 = vcmp.le.s32.totalorder %v2100, 8
        %vm2141 = vcmp.le.s32.totalorder %v2101, 8
        %vm2142 = vcmp.le.s32.totalorder %v2102, 8
        %vm2143 = vcmp.le.s32.totalorder %v2103, 8
        %vm2144 = vcmp.le.s32.totalorder %v2104, 8
        %vm2145 = vcmp.le.s32.totalorder %v2105, 8
        %vm2146 = vcmp.le.s32.totalorder %v2106, 8
        %vm2147 = vcmp.le.s32.totalorder %v2107, 8
        %vm2148 = vcmp.le.s32.totalorder %v2108, 8
        %vm2149 = vmand %vm2109, %vm2129
        %vm2150 = vmand %vm2110, %vm2130
        %vm2151 = vmand %vm2111, %vm2131
        %vm2152 = vmand %vm2112, %vm2132
        %vm2153 = vmand %vm2113, %vm2133
        %vm2154 = vmand %vm2114, %vm2134
        %vm2155 = vmand %vm2115, %vm2135
        %vm2156 = vmand %vm2116, %vm2136
        %vm2157 = vmand %vm2117, %vm2137
        %vm2158 = vmand %vm2118, %vm2138
        %vm2159 = vmand %vm2119, %vm2139
        %vm2160 = vmand %vm2120, %vm2140
        %vm2161 = vmand %vm2121, %vm2141
        %vm2162 = vmand %vm2122, %vm2142
        %vm2163 = vmand %vm2123, %vm2143
        %vm2164 = vmand %vm2124, %vm2144
        %vm2165 = vmand %vm2125, %vm2145
        %vm2166 = vmand %vm2126, %vm2146
        %vm2167 = vmand %vm2127, %vm2147
        %vm2168 = vmand %vm2128, %vm2148
        %vm2169 = vmand %vm2069, %vm2149
        %vm2170 = vmand %vm2070, %vm2150
        %vm2171 = vmand %vm2071, %vm2151
        %vm2172 = vmand %vm2072, %vm2152
        %vm2173 = vmand %vm2073, %vm2153
        %vm2174 = vmand %vm2074, %vm2154
        %vm2175 = vmand %vm2075, %vm2155
        %vm2176 = vmand %vm2076, %vm2156
        %vm2177 = vmand %vm2077, %vm2157
        %vm2178 = vmand %vm2078, %vm2158
        %vm2179 = vmand %vm2079, %vm2159
        %vm2180 = vmand %vm2080, %vm2160
        %vm2181 = vmand %vm2081, %vm2161
        %vm2182 = vmand %vm2082, %vm2162
        %vm2183 = vmand %vm2083, %vm2163
        %vm2184 = vmand %vm2084, %vm2164
        %vm2185 = vmand %vm2085, %vm2165
        %vm2186 = vmand %vm2086, %vm2166
        %vm2187 = vmand %vm2087, %vm2167
        %vm2188 = vmand %vm2088, %vm2168
        %v2189 = vsel %vm2169, %v1988, 0.0
        %v2190 = vsel %vm2170, %v1989, 0.0
        %v2191 = vsel %vm2171, %v1990, 0.0
        %v2192 = vsel %vm2172, %v1991, 0.0
        %v2193 = vsel %vm2173, %v1992, 0.0
        %v2194 = vsel %vm2174, %v1993, 0.0
        %v2195 = vsel %vm2175, %v1994, 0.0
        %v2196 = vsel %vm2176, %v1995, 0.0
        %v2197 = vsel %vm2177, %v1996, 0.0
        %v2198 = vsel %vm2178, %v1997, 0.0
        %v2199 = vsel %vm2179, %v1998, 0.0
        %v2200 = vsel %vm2180, %v1999, 0.0
        %v2201 = vsel %vm2181, %v2000, 0.0
        %v2202 = vsel %vm2182, %v2001, 0.0
        %v2203 = vsel %vm2183, %v2002, 0.0
        %v2204 = vsel %vm2184, %v2003, 0.0
        %v2205 = vsel %vm2185, %v2004, 0.0
        %v2206 = vsel %vm2186, %v2005, 0.0
        %v2207 = vsel %vm2187, %v2006, 0.0
        %v2208 = vsel %vm2188, %v2007, 0.0
        %v2209 = vpack.c.bf16 %v2190, %v2189
        %v2210 = vpack.c.bf16 %v2192, %v2191
        %v2211 = vpack.c.bf16 %v2194, %v2193
        %v2212 = vpack.c.bf16 %v2196, %v2195
        %v2213 = vpack.c.bf16 %v2198, %v2197
        %v2214 = vpack.c.bf16 %v2200, %v2199
        %v2215 = vpack.c.bf16 %v2202, %v2201
        %v2216 = vpack.c.bf16 %v2204, %v2203
        %v2217 = vpack.c.bf16 %v2206, %v2205
        %v2218 = vpack.c.bf16 %v2208, %v2207
        %v2229 = vunpack.c.l.b16 %v2209
        %v2230 = vunpack.c.h.b16 %v2209
        %v2231 = vunpack.c.l.b16 %v2210
        %v2232 = vunpack.c.h.b16 %v2210
        %v2233 = vunpack.c.l.b16 %v2211
        %v2234 = vunpack.c.h.b16 %v2211
        %v2235 = vunpack.c.l.b16 %v2212
        %v2236 = vunpack.c.h.b16 %v2212
        %v2237 = vunpack.c.l.b16 %v2213
        %v2238 = vunpack.c.h.b16 %v2213
        %v2239 = vunpack.c.l.b16 %v2214
        %v2240 = vunpack.c.h.b16 %v2214
        %v2241 = vunpack.c.l.b16 %v2215
        %v2242 = vunpack.c.h.b16 %v2215
        %v2243 = vunpack.c.l.b16 %v2216
        %v2244 = vunpack.c.h.b16 %v2216
        %v2245 = vunpack.c.l.b16 %v2217
        %v2246 = vunpack.c.h.b16 %v2217
        %v2247 = vunpack.c.l.b16 %v2218
        %v2248 = vunpack.c.h.b16 %v2218
        %v2249 = vpack.c.b16 %v2229, %v2229
        %v2250 = vpack.c.b16 %v2230, %v2230
        %v2251 = vpack.c.b16 %v2231, %v2231
        %v2252 = vpack.c.b16 %v2232, %v2232
        %v2253 = vpack.c.b16 %v2233, %v2233
        %v2254 = vpack.c.b16 %v2234, %v2234
        %v2255 = vpack.c.b16 %v2235, %v2235
        %v2256 = vpack.c.b16 %v2236, %v2236
        %v2257 = vpack.c.b16 %v2237, %v2237
        %v2258 = vpack.c.b16 %v2238, %v2238
        %v2259 = vpack.c.b16 %v2239, %v2239
        %v2260 = vpack.c.b16 %v2240, %v2240
        %v2261 = vpack.c.b16 %v2241, %v2241
        %v2262 = vpack.c.b16 %v2242, %v2242
        %v2263 = vpack.c.b16 %v2243, %v2243
        %v2264 = vpack.c.b16 %v2244, %v2244
        %v2265 = vpack.c.b16 %v2245, %v2245
        %v2266 = vpack.c.b16 %v2246, %v2246
        %v2267 = vpack.c.b16 %v2247, %v2247
        %v2268 = vpack.c.b16 %v2248, %v2248
        %2289 = vst [vmem:[%s273] sm:$0xf] %v2249
        %2290 = vst [vmem:[%s273 + $0x4] sm:$0xf] %v2250
        %2291 = vst [vmem:[%s273 + $0x8] sm:$0xf] %v2251
        %2292 = vst [vmem:[%s273 + $0xc] sm:$0xf] %v2252
        %2293 = vst [vmem:[%s273 + $0x10] sm:$0xf] %v2253
        %2294 = vst [vmem:[%s273 + $0x14] sm:$0xf] %v2254
        %2295 = vst [vmem:[%s273 + $0x18] sm:$0xf] %v2255
        %2296 = vst [vmem:[%s273 + $0x1c] sm:$0xf] %v2256
        %2297 = vst [vmem:[%s273 + $0x20] sm:$0xf] %v2257
        %2298 = vst [vmem:[%s273 + $0x24] sm:$0xf] %v2258
        %2299 = vst [vmem:[%s273 + $0x28] sm:$0xf] %v2259
        %2300 = vst [vmem:[%s273 + $0x2c] sm:$0xf] %v2260
        %2301 = vst [vmem:[%s273 + $0x30] sm:$0xf] %v2261
        %2302 = vst [vmem:[%s273 + $0x34] sm:$0xf] %v2262
        %2303 = vst [vmem:[%s273 + $0x38] sm:$0xf] %v2263
        %2304 = vst [vmem:[%s273 + $0x3c] sm:$0xf] %v2264
        %2305 = vst [vmem:[%s273 + $0x40] sm:$0xf] %v2265
        %2306 = vst [vmem:[%s273 + $0x44] sm:$0xf] %v2266
        %2307 = vst [vmem:[%s273 + $0x48] sm:$0xf] %v2267
        %2308 = vst [vmem:[%s273 + $0x4c] sm:$0xf] %v2268
        %s2309 = sand.u32 %s148, 1
        %s2310 = scalar_lea.sflag [#allocation4], %s2309
        %s2311 = sand.u32 %s148, 1
        %s2312 = smul.addr %s2311, 80
        %s2313 = scalar_lea.vmem [#allocation7], %s2312
        // Predicated region
        $region45: #{tpu_custom_call.1} parent=35 // pred_check
          %p2314 = pneg %p158
        $region46: #{tpu_custom_call.1} parent=35 // pred_check_branch
          %2316 = sbr.rel (%p2314) target = $region48
        $region47: #{tpu_custom_call.1} parent=35 // pred_region
          %s2318 = ssub.s32 1280, 1280
          %2319 = vsyncadd %s2310, %s2318
          %s2320 = smul.addr %s26, 20
          %s2321 = sadd.s32 %s27, %s2320
          %s2322 = smul.addr %s2321, 64
          %s2323 = scalar_lea.hbm %s4, %s2322
          %s2324 = sshll.u32 %s2313, 4
          %s2325 = int_to_ptr.vmem [resolvable:$true] %s2324
          %2330 = dma.vmem_to_hbm [thread:$0]  %s2325, 1280, %s2323, %s2310, 64, 64, 4
        $region48: #{tpu_custom_call.1} parent=35 // pred_fallthru
          _
      $region36: #{tpu_custom_call.1} parent=5 // pred_fallthru
        _
      %p2331 = scmp.le.s32.totalorder 2, %s17
      // Predicated region
      $region49: #{tpu_custom_call.1} parent=5 // pred_check
        %p2332 = pneg %p2331
      $region50: #{tpu_custom_call.1} parent=5 // pred_check_branch
        %2334 = sbr.rel (%p2332) target = $region52
      $region51: #{tpu_custom_call.1} parent=5 // pred_region
        %s2335 = ssub.s32 %s17, 2
        // Predicated region
        $region53: #{tpu_custom_call.1} parent=51 // pred_check
          %p2336 = pneg %p164
        $region54: #{tpu_custom_call.1} parent=51 // pred_check_branch
          %2338 = sbr.rel (%p2336) target = $region56
        $region55: #{tpu_custom_call.1} parent=51 // pred_region
          %s2339 = sand.u32 %s149, 1
          %s2340 = scalar_lea.sflag [#allocation4], %s2339
          %s2341 = sand.u32 %s149, 1
          %s2342 = smul.addr %s2341, 80
          %s2343 = scalar_lea.vmem [#allocation7], %s2342
          %2344 = dma.done %s2340, 1280
        $region56: #{tpu_custom_call.1} parent=51 // pred_fallthru
          _
      $region52: #{tpu_custom_call.1} parent=5 // pred_fallthru
        _
    $region6: #{tpu_custom_call.1} parent=1 // loop_footer
      %s21 = sadd.s32 1, %s17
    $region7: #{tpu_custom_call.1} parent=1 // loop_footer_branch
      %16 = sbr.rel target = $region3
    $region8: #{tpu_custom_call.1} parent=1 // loop_exit
      _
    %2345 = vsyncpa [#allocation3], 1
    %s2346 = scalar_lea.sflag [#allocation3], 1
    %2347 = vsyncpa %s2346, 1
    %2348 = vsyncpa [#allocation6], 1
    %2349 = vsyncpa [#allocation4], 1
    %s2350 = scalar_lea.sflag [#allocation4], 1
    %2351 = vsyncpa %s2350, 1

</llo_original>
